<compile_context>
chip_gen: v6e
topology: v6e:2x2x1
jax: 0.10.0
libtpu: 0.0.40
codegen_flags: <defaults>
</compile_context>

<pallas_src>
import functools

import jax
import jax.numpy as jnp
from jax import lax
from jax.experimental import pallas as pl
from jax.experimental.pallas import tpu as pltpu


def _round_up(x, m):
    return ((x + m - 1) // m) * m


def _device_kind():
    try:
        return jax.devices()[0].device_kind.lower()
    except Exception:
        return ""


def _per_gen_caps(kind):
    """(cap_tm, cap_tn, vmem_budget_bytes) per TPU generation."""
    if "v5" in kind:
        return 1024, 1024, 96 << 20      # 128 MiB VMEM
    if "v6" in kind:
        return 1024, 2048, 96 << 20      # 128 MiB VMEM
    if "v7" in kind:
        return 1024, 1024, 44 << 20      # 64 MiB VMEM / TC
    return 512, 1024, 28 << 20           # unknown: stay conservative


def _resolve_bf16_exp(use_bf16_exp, kind):
    """bf16 EUP exp: default-on for v6e/v7x, force-off where no bf16 EUP exists."""
    has_bf16_eup = ("v6" in kind) or ("v7" in kind)
    if not has_bf16_eup:
        return False                     # v5e/older: cast round-trip is a pure loss
    if use_bf16_exp is None:
        return True                      # v6e/v7x default: ~2x exp throughput
    return bool(use_bf16_exp)


def _choose_tile(size, cap, gran):
    """Pick a tile that is a multiple of `gran`, <= cap, and divides the padded
    extent with minimal throw-away work."""
    size_g = _round_up(max(int(size), 1), gran)
    if size_g <= cap:
        return size_g
    n_blocks = -(-size_g // cap)                 # ceil div
    return _round_up(-(-size_g // n_blocks), gran)


def _vmem_bytes(K, da, tm, tn):
    """Estimated double-buffered VMEM footprint (f32, (8,128) tile padding)."""
    lane, sub = 128, 8
    out_b = tm * tn * 4                          # output tile
    x1_b = K * da * tm * lane * 4                # (K,da,tm,1) -> lanes pad to 128
    x2_b = K * da * sub * tn * 4                 # (K,da,1,tn) -> sublanes pad to 8
    hn1_b = K * tm * lane * 4
    hn2_b = K * sub * tn * 4
    return 2 * (out_b + x1_b + x2_b + hn1_b + hn2_b)


def _additive_rbf_kernel(x1_ref, x2_ref, hn1_ref, hn2_ref, o_ref, *,
                         n_comp, da, tm, tn, zero_diag, use_bf16_exp):
    """One grid step = one (tm, tn) output tile; all K components summed in-kernel.

    x1_ref:  (K, da, tm, 1)  scaled active-dim columns for this row block.
    x2_ref:  (K, da, 1, tn)  scaled active-dim rows (lane-dense) for this col block.
    hn1_ref: (K, tm, 1)      0.5 * ||x1||^2 per row (precomputed in wrapper).
    hn2_ref: (K, 1, tn)      0.5 * ||x2||^2 per col (precomputed in wrapper).
    o_ref:   (tm, tn) f32 output tile, written exactly once.
    """
    row0 = pl.program_id(0) * tm
    col0 = pl.program_id(1) * tn

    def compute_tile(apply_diag):
        if apply_diag:
            # Small iotas + broadcast compare: no full-tile int32 temporaries.
            rows = lax.broadcasted_iota(jnp.int32, (tm, 1), 0) + row0
            cols = lax.broadcasted_iota(jnp.int32, (1, tn), 1) + col0
            diag = rows == cols                            # (tm, tn) bool
        acc = None
        for k in range(n_comp):
            # Cross term on the VPU (da tiny; a (tm,da)x(da,tn) MXU matmul would
            # be degenerate here).
            # TODO(synk): for da >~ 4 switch the cross term to a lane-dense MXU
            # jnp.dot per component (MXU slot is idle in this kernel).
            prod = x1_ref[k, 0] * x2_ref[k, 0]             # (tm,1)*(1,tn) -> (tm,tn)
            for d in range(1, da):
                prod = prod + x1_ref[k, d] * x2_ref[k, d]
            # Folded Distance._jit_sq_dist:
            #   arg = -0.5 * sq_dist = prod - 0.5||x1||^2 - 0.5||x2||^2
            #   clamp_min(sq, 0)  ==  minimum(arg, 0)      (sign flipped)
            #   diagonal().fill_(0) == where(diag, 0, arg)
            arg = prod - hn1_ref[k] - hn2_ref[k]
            arg = jnp.minimum(arg, 0.0)
            if apply_diag:
                arg = jnp.where(diag, 0.0, arg)
            if use_bf16_exp:
                # v6e/v7x: bf16 EUP exp ~2x throughput; accumulation stays f32.
                kmat = jnp.exp(arg.astype(jnp.bfloat16)).astype(jnp.float32)
            else:
                kmat = jnp.exp(arg)
            acc = kmat if acc is None else acc + kmat
        return acc

    if zero_diag:
        # Only tiles whose global row/col ranges intersect the diagonal pay for
        # the iota + compare + select.
        intersects = jnp.logical_and(row0 < col0 + tn, col0 < row0 + tm)

        @pl.when(intersects)
        def _():
            o_ref[...] = compute_tile(True)

        @pl.when(jnp.logical_not(intersects))
        def _():
            o_ref[...] = compute_tile(False)
    else:
        o_ref[...] = compute_tile(False)


def additive_rbf_gram(x1_scaled, x2_scaled, *, x1_eq_x2, tm=None, tn=None,
                      use_bf16_exp=None):
    """x1_scaled: (K, n, da), x2_scaled: (K, m, da) f32 (active dims / lengthscale)."""
    x1_scaled = jnp.asarray(x1_scaled, jnp.float32)
    x2_scaled = jnp.asarray(x2_scaled, jnp.float32)
    K, n, da = x1_scaled.shape
    Kb, m, dab = x2_scaled.shape
    assert K == Kb and da == dab, "component count / active-dim count mismatch"

    kind = _device_kind()
    use_bf16_exp = _resolve_bf16_exp(use_bf16_exp, kind)
    cap_tm, cap_tn, vmem_budget = _per_gen_caps(kind)

    tm = _choose_tile(n, cap_tm, 8) if tm is None else _round_up(int(tm), 8)
    tn = _choose_tile(m, cap_tn, 128) if tn is None else _round_up(int(tn), 128)

    # Shrink tiles until the estimated double-buffered footprint fits the budget.
    # TODO(synk): for very large K*da, repack x1 lane-dense and broadcast in-kernel
    # instead of the (tm,1) column layout (which pads each column to 128 lanes).
    while _vmem_bytes(K, da, tm, tn) > vmem_budget:
        if tn > 128:
            tn = max(128, _round_up(tn // 2, 128))
        elif tm > 8:
            tm = max(8, _round_up(tm // 2, 8))
        else:
            break

    # Pad only to (8,128) granularity / tile multiples (tiles were sized to divide
    # the padded extent tightly, so no whole-tile throw-away work).
    n_pad = _round_up(_round_up(n, 8), tm)
    m_pad = _round_up(_round_up(m, 128), tn)

    # Layout plumbing in the wrapper (no in-kernel transposes):
    #   row block broadcasts x1 as (tm, 1) columns,
    #   col block broadcasts x2 as (1, tn) lane-dense rows,
    #   half-norms precomputed once (not per tile).
    x1_cols = jnp.transpose(x1_scaled, (0, 2, 1))[..., None]        # (K, da, n, 1)
    x2_rows = jnp.transpose(x2_scaled, (0, 2, 1))[:, :, None, :]    # (K, da, 1, m)
    hn1 = 0.5 * jnp.sum(x1_scaled * x1_scaled, axis=-1)             # (K, n)
    hn2 = 0.5 * jnp.sum(x2_scaled * x2_scaled, axis=-1)             # (K, m)
    if n_pad != n:
        x1_cols = jnp.pad(x1_cols, ((0, 0), (0, 0), (0, n_pad - n), (0, 0)))
        hn1 = jnp.pad(hn1, ((0, 0), (0, n_pad - n)))
    if m_pad != m:
        x2_rows = jnp.pad(x2_rows, ((0, 0), (0, 0), (0, 0), (0, m_pad - m)))
        hn2 = jnp.pad(hn2, ((0, 0), (0, m_pad - m)))
    hn1 = hn1[:, :, None]                                           # (K, n_pad, 1)
    hn2 = hn2[:, None, :]                                           # (K, 1, m_pad)

    grid = (n_pad // tm, m_pad // tn)

    kernel = functools.partial(
        _additive_rbf_kernel, n_comp=K, da=da, tm=tm, tn=tn,
        zero_diag=bool(x1_eq_x2), use_bf16_exp=bool(use_bf16_exp))

    cost = pl.CostEstimate(
        flops=int(K * n_pad * m_pad * (2 * da + 4)),
        transcendentals=int(K * n_pad * m_pad),
        bytes_accessed=int(4 * (n_pad * m_pad + K * (da + 1) * (n_pad + m_pad))),
    )

    vmem_limit = min(_vmem_bytes(K, da, tm, tn) + (8 << 20), vmem_budget + (16 << 20))

    out = pl.pallas_call(
        kernel,
        out_shape=jax.ShapeDtypeStruct((n_pad, m_pad), jnp.float32),
        grid_spec=pltpu.PrefetchScalarGridSpec(
            num_scalar_prefetch=0,
            grid=grid,
            in_specs=[
                pl.BlockSpec((K, da, tm, 1), lambda i, j: (0, 0, i, 0)),
                pl.BlockSpec((K, da, 1, tn), lambda i, j: (0, 0, 0, j)),
                pl.BlockSpec((K, tm, 1), lambda i, j: (0, i, 0)),
                pl.BlockSpec((K, 1, tn), lambda i, j: (0, 0, j)),
            ],
            out_specs=pl.BlockSpec((tm, tn), lambda i, j: (i, j)),
        ),
        compiler_params=pltpu.CompilerParams(
            dimension_semantics=("parallel", "parallel"),
            vmem_limit_bytes=int(vmem_limit),
        ),
        cost_estimate=cost,
    )(x1_cols, x2_rows, hn1, hn2)

    if n_pad != n or m_pad != m:
        out = out[:n, :m]
    return out
    # TODO(synk): optional symmetry exploitation (compute only j >= i tiles and
    # mirror) — profitable on v7x where the kernel is compute-bound.


def additive_kernel_forward(x, active_dims_list, raw_lengthscales, eps=1e-6,
                            tm=None, tn=None, use_bf16_exp=None):
    """Glue mirroring Kernel.__call__ / RBFKernel.forward / AdditiveKernel.forward.

    x: (n, d). active_dims_list: list of K index lists (each length da).
    raw_lengthscales: (K,) raw params (softplus + clamp applied here).
    """
    ls = jnp.clip(jax.nn.softplus(jnp.asarray(raw_lengthscales, jnp.float32)),
                  eps, 1e5)                                   # (K,)
    parts = []
    for k, ad in enumerate(active_dims_list):
        xk = x[:, jnp.asarray(ad, dtype=jnp.int32)]           # index_select(-1, active_dims)
        parts.append(xk / ls[k])                              # RBFKernel: x.div(lengthscale)
    da = parts[0].shape[-1]
    assert all(p.shape[-1] == da for p in parts), "components must share active-dim count"
    x1_scaled = jnp.stack(parts, axis=0).astype(jnp.float32)  # (K, n, da)
    # x2 is None in the canonical AdditiveKernel call -> x2_ = x1_, x1_eq_x2 = True.
    return additive_rbf_gram(x1_scaled, x1_scaled, x1_eq_x2=True,
                             tm=tm, tn=tn, use_bf16_exp=use_bf16_exp)


def _reference(x, active_dims_list, raw_lengthscales, eps=1e-6):
    ls = jnp.clip(jax.nn.softplus(jnp.asarray(raw_lengthscales, jnp.float32)),
                  eps, 1e5)
    n = x.shape[0]
    out = jnp.zeros((n, n), jnp.float32)
    for k, ad in enumerate(active_dims_list):
        xk = x[:, jnp.asarray(ad, dtype=jnp.int32)] / ls[k]
        nrm = jnp.sum(xk * xk, axis=-1, keepdims=True)
        sq = nrm + nrm.T - 2.0 * xk @ xk.T
        sq = jnp.where(jnp.eye(n, dtype=bool), 0.0, sq)
        sq = jnp.maximum(sq, 0.0)
        out = out + jnp.exp(-0.5 * sq)
    return out


if __name__ == "__main__":
    key = jax.random.PRNGKey(0)
    n, d = 384, 8
    x = jax.random.normal(key, (n, d), dtype=jnp.float32)

    # Two component RBF kernels, each on one active dimension (module docstring example).
    active_dims_list = [[1], [2]]
    # Deterministic init: raw_lengthscale = zeros (per Kernel.__init__).
    raw_lengthscales = jnp.zeros((len(active_dims_list),), dtype=jnp.float32)

    ref = _reference(x, active_dims_list, raw_lengthscales)

    # 1) f32 exp path with small explicit tiles: exercises a multi-tile grid with
    #    both diagonal and off-diagonal tiles; numerics match PyTorch f32.
    out_f32 = additive_kernel_forward(x, active_dims_list, raw_lengthscales,
                                      tm=128, tn=128, use_bf16_exp=False)
    out_f32 = jax.block_until_ready(out_f32)
    assert out_f32.shape == (n, n)
    assert jnp.allclose(out_f32, ref, atol=1e-5, rtol=1e-5), "f32 path mismatch vs reference"

    # 2) Default production path: per-generation tiles, bf16 EUP exp auto-enabled
    #    on v6e/v7x (relaxed tolerance), force-f32 on v5e/older.
    out_auto = jax.block_until_ready(
        additive_kernel_forward(x, active_dims_list, raw_lengthscales))
    assert out_auto.shape == (n, n)
    assert jnp.allclose(out_auto, ref, atol=3e-2, rtol=3e-2), "default path mismatch vs reference"

    print("KERNEL_OK")
</pallas_src>

<mosaic_0001>
module attributes {stable_mosaic.version = 11 : i64} {
  func.func @_additive_rbf_kernel(%arg0: i32, %arg1: i32, %arg2: memref<2x1x128x1xf32, #tpu.memory_space<vmem>>, %arg3: memref<2x1x1x128xf32, #tpu.memory_space<vmem>>, %arg4: memref<2x128x1xf32, #tpu.memory_space<vmem>>, %arg5: memref<2x1x128xf32, #tpu.memory_space<vmem>>, %arg6: memref<128x128xf32, #tpu.memory_space<vmem>>) attributes {dimension_semantics = [#tpu.dimension_semantics<parallel>, #tpu.dimension_semantics<parallel>], iteration_bounds = array<i64: 3, 3>, scalar_prefetch = 0 : i64, scratch_operands = 0 : i64, tpu.core_type = #tpu.core_type<tc>, window_params = [{transform_indices = @transform_0, window_bounds = array<i64: 2, 1, 128, 1>}, {transform_indices = @transform_1, window_bounds = array<i64: 2, 1, 1, 128>}, {transform_indices = @transform_2, window_bounds = array<i64: 2, 128, 1>}, {transform_indices = @transform_3, window_bounds = array<i64: 2, 1, 128>}, {transform_indices = @transform_4, window_bounds = array<i64: 128, 128>}]} {
    %c128_i32 = arith.constant 128 : i32
    %0 = arith.muli %arg0, %c128_i32 : i32
    %c128_i32_0 = arith.constant 128 : i32
    %1 = arith.muli %arg1, %c128_i32_0 : i32
    %c128_i32_1 = arith.constant 128 : i32
    %2 = arith.addi %1, %c128_i32_1 : i32
    %3 = arith.cmpi slt, %0, %2 : i32
    %c128_i32_2 = arith.constant 128 : i32
    %4 = arith.addi %0, %c128_i32_2 : i32
    %5 = arith.cmpi slt, %1, %4 : i32
    %6 = arith.andi %3, %5 : i1
    %7 = arith.extui %6 : i1 to i32
    %c0_i32 = arith.constant 0 : i32
    %8 = arith.cmpi ne, %7, %c0_i32 : i32
    scf.if %8 {
      %12 = tpu.iota {dimensions = array<i32: 0>} : vector<128x1xi32>
      %13 = vector.broadcast %0 : i32 to vector<128x1xi32>
      %14 = arith.addi %12, %13 : vector<128x1xi32>
      %15 = tpu.iota {dimensions = array<i32: 1>} : vector<1x128xi32>
      %16 = vector.broadcast %1 : i32 to vector<1x128xi32>
      %17 = arith.addi %15, %16 : vector<1x128xi32>
      %18 = vector.broadcast %14 : vector<128x1xi32> to vector<128x128xi32>
      %19 = vector.broadcast %17 : vector<1x128xi32> to vector<128x128xi32>
      %20 = arith.cmpi eq, %18, %19 : vector<128x128xi32>
      %c0 = arith.constant 0 : index
      %c0_4 = arith.constant 0 : index
      %c0_5 = arith.constant 0 : index
      %c0_6 = arith.constant 0 : index
      %21 = vector.load %arg2[%c0, %c0_4, %c0_5, %c0_6] : memref<2x1x128x1xf32, #tpu.memory_space<vmem>>, vector<1x1x128x1xf32>
      %22 = vector.shape_cast %21 : vector<1x1x128x1xf32> to vector<128x1xf32>
      %c0_7 = arith.constant 0 : index
      %c0_8 = arith.constant 0 : index
      %c0_9 = arith.constant 0 : index
      %c0_10 = arith.constant 0 : index
      %23 = vector.load %arg3[%c0_7, %c0_8, %c0_9, %c0_10] : memref<2x1x1x128xf32, #tpu.memory_space<vmem>>, vector<1x1x1x128xf32>
      %24 = vector.shape_cast %23 : vector<1x1x1x128xf32> to vector<1x128xf32>
      %25 = vector.broadcast %22 : vector<128x1xf32> to vector<128x128xf32>
      %26 = vector.broadcast %24 : vector<1x128xf32> to vector<128x128xf32>
      %27 = arith.mulf %25, %26 : vector<128x128xf32>
      %c0_11 = arith.constant 0 : index
      %c0_12 = arith.constant 0 : index
      %c0_13 = arith.constant 0 : index
      %28 = vector.load %arg4[%c0_11, %c0_12, %c0_13] : memref<2x128x1xf32, #tpu.memory_space<vmem>>, vector<1x128x1xf32>
      %29 = vector.shape_cast %28 : vector<1x128x1xf32> to vector<128x1xf32>
      %30 = vector.broadcast %29 : vector<128x1xf32> to vector<128x128xf32>
      %31 = arith.subf %27, %30 : vector<128x128xf32>
      %c0_14 = arith.constant 0 : index
      %c0_15 = arith.constant 0 : index
      %c0_16 = arith.constant 0 : index
      %32 = vector.load %arg5[%c0_14, %c0_15, %c0_16] : memref<2x1x128xf32, #tpu.memory_space<vmem>>, vector<1x1x128xf32>
      %33 = vector.shape_cast %32 : vector<1x1x128xf32> to vector<1x128xf32>
      %34 = vector.broadcast %33 : vector<1x128xf32> to vector<128x128xf32>
      %35 = arith.subf %31, %34 : vector<128x128xf32>
      %cst = arith.constant 0.000000e+00 : f32
      %36 = vector.broadcast %cst : f32 to vector<128x128xf32>
      %37 = arith.minimumf %35, %36 : vector<128x128xf32>
      %cst_17 = arith.constant 0.000000e+00 : f32
      %38 = vector.broadcast %cst_17 : f32 to vector<128x128xf32>
      %39 = arith.select %20, %38, %37 : vector<128x128xi1>, vector<128x128xf32>
      %40 = math.exp %39 : vector<128x128xf32>
      %c1 = arith.constant 1 : index
      %c0_18 = arith.constant 0 : index
      %c0_19 = arith.constant 0 : index
      %c0_20 = arith.constant 0 : index
      %41 = vector.load %arg2[%c1, %c0_18, %c0_19, %c0_20] : memref<2x1x128x1xf32, #tpu.memory_space<vmem>>, vector<1x1x128x1xf32>
      %42 = vector.shape_cast %41 : vector<1x1x128x1xf32> to vector<128x1xf32>
      %c1_21 = arith.constant 1 : index
      %c0_22 = arith.constant 0 : index
      %c0_23 = arith.constant 0 : index
      %c0_24 = arith.constant 0 : index
      %43 = vector.load %arg3[%c1_21, %c0_22, %c0_23, %c0_24] : memref<2x1x1x128xf32, #tpu.memory_space<vmem>>, vector<1x1x1x128xf32>
      %44 = vector.shape_cast %43 : vector<1x1x1x128xf32> to vector<1x128xf32>
      %45 = vector.broadcast %42 : vector<128x1xf32> to vector<128x128xf32>
      %46 = vector.broadcast %44 : vector<1x128xf32> to vector<128x128xf32>
      %47 = arith.mulf %45, %46 : vector<128x128xf32>
      %c1_25 = arith.constant 1 : index
      %c0_26 = arith.constant 0 : index
      %c0_27 = arith.constant 0 : index
      %48 = vector.load %arg4[%c1_25, %c0_26, %c0_27] : memref<2x128x1xf32, #tpu.memory_space<vmem>>, vector<1x128x1xf32>
      %49 = vector.shape_cast %48 : vector<1x128x1xf32> to vector<128x1xf32>
      %50 = vector.broadcast %49 : vector<128x1xf32> to vector<128x128xf32>
      %51 = arith.subf %47, %50 : vector<128x128xf32>
      %c1_28 = arith.constant 1 : index
      %c0_29 = arith.constant 0 : index
      %c0_30 = arith.constant 0 : index
      %52 = vector.load %arg5[%c1_28, %c0_29, %c0_30] : memref<2x1x128xf32, #tpu.memory_space<vmem>>, vector<1x1x128xf32>
      %53 = vector.shape_cast %52 : vector<1x1x128xf32> to vector<1x128xf32>
      %54 = vector.broadcast %53 : vector<1x128xf32> to vector<128x128xf32>
      %55 = arith.subf %51, %54 : vector<128x128xf32>
      %cst_31 = arith.constant 0.000000e+00 : f32
      %56 = vector.broadcast %cst_31 : f32 to vector<128x128xf32>
      %57 = arith.minimumf %55, %56 : vector<128x128xf32>
      %cst_32 = arith.constant 0.000000e+00 : f32
      %58 = vector.broadcast %cst_32 : f32 to vector<128x128xf32>
      %59 = arith.select %20, %58, %57 : vector<128x128xi1>, vector<128x128xf32>
      %60 = math.exp %59 : vector<128x128xf32>
      %61 = arith.addf %40, %60 : vector<128x128xf32>
      %c0_33 = arith.constant 0 : index
      %c0_34 = arith.constant 0 : index
      %62 = vector.load %arg6[%c0_33, %c0_34] : memref<128x128xf32, #tpu.memory_space<vmem>>, vector<128x128xf32>
      tpu.vector_store %arg6[%c0_33, %c0_34], %61 {strides = array<i32>} : memref<128x128xf32, #tpu.memory_space<vmem>>, vector<128x128xf32>,
    } else {
    }
    %true = arith.constant true
    %9 = arith.xori %6, %true : i1
    %10 = arith.extui %9 : i1 to i32
    %c0_i32_3 = arith.constant 0 : i32
    %11 = arith.cmpi ne, %10, %c0_i32_3 : i32
    scf.if %11 {
      %c0 = arith.constant 0 : index
      %c0_4 = arith.constant 0 : index
      %c0_5 = arith.constant 0 : index
      %c0_6 = arith.constant 0 : index
      %12 = vector.load %arg2[%c0, %c0_4, %c0_5, %c0_6] : memref<2x1x128x1xf32, #tpu.memory_space<vmem>>, vector<1x1x128x1xf32>
      %13 = vector.shape_cast %12 : vector<1x1x128x1xf32> to vector<128x1xf32>
      %c0_7 = arith.constant 0 : index
      %c0_8 = arith.constant 0 : index
      %c0_9 = arith.constant 0 : index
      %c0_10 = arith.constant 0 : index
      %14 = vector.load %arg3[%c0_7, %c0_8, %c0_9, %c0_10] : memref<2x1x1x128xf32, #tpu.memory_space<vmem>>, vector<1x1x1x128xf32>
      %15 = vector.shape_cast %14 : vector<1x1x1x128xf32> to vector<1x128xf32>
      %16 = vector.broadcast %13 : vector<128x1xf32> to vector<128x128xf32>
      %17 = vector.broadcast %15 : vector<1x128xf32> to vector<128x128xf32>
      %18 = arith.mulf %16, %17 : vector<128x128xf32>
      %c0_11 = arith.constant 0 : index
      %c0_12 = arith.constant 0 : index
      %c0_13 = arith.constant 0 : index
      %19 = vector.load %arg4[%c0_11, %c0_12, %c0_13] : memref<2x128x1xf32, #tpu.memory_space<vmem>>, vector<1x128x1xf32>
      %20 = vector.shape_cast %19 : vector<1x128x1xf32> to vector<128x1xf32>
      %21 = vector.broadcast %20 : vector<128x1xf32> to vector<128x128xf32>
      %22 = arith.subf %18, %21 : vector<128x128xf32>
      %c0_14 = arith.constant 0 : index
      %c0_15 = arith.constant 0 : index
      %c0_16 = arith.constant 0 : index
      %23 = vector.load %arg5[%c0_14, %c0_15, %c0_16] : memref<2x1x128xf32, #tpu.memory_space<vmem>>, vector<1x1x128xf32>
      %24 = vector.shape_cast %23 : vector<1x1x128xf32> to vector<1x128xf32>
      %25 = vector.broadcast %24 : vector<1x128xf32> to vector<128x128xf32>
      %26 = arith.subf %22, %25 : vector<128x128xf32>
      %cst = arith.constant 0.000000e+00 : f32
      %27 = vector.broadcast %cst : f32 to vector<128x128xf32>
      %28 = arith.minimumf %26, %27 : vector<128x128xf32>
      %29 = math.exp %28 : vector<128x128xf32>
      %c1 = arith.constant 1 : index
      %c0_17 = arith.constant 0 : index
      %c0_18 = arith.constant 0 : index
      %c0_19 = arith.constant 0 : index
      %30 = vector.load %arg2[%c1, %c0_17, %c0_18, %c0_19] : memref<2x1x128x1xf32, #tpu.memory_space<vmem>>, vector<1x1x128x1xf32>
      %31 = vector.shape_cast %30 : vector<1x1x128x1xf32> to vector<128x1xf32>
      %c1_20 = arith.constant 1 : index
      %c0_21 = arith.constant 0 : index
      %c0_22 = arith.constant 0 : index
      %c0_23 = arith.constant 0 : index
      %32 = vector.load %arg3[%c1_20, %c0_21, %c0_22, %c0_23] : memref<2x1x1x128xf32, #tpu.memory_space<vmem>>, vector<1x1x1x128xf32>
      %33 = vector.shape_cast %32 : vector<1x1x1x128xf32> to vector<1x128xf32>
      %34 = vector.broadcast %31 : vector<128x1xf32> to vector<128x128xf32>
      %35 = vector.broadcast %33 : vector<1x128xf32> to vector<128x128xf32>
      %36 = arith.mulf %34, %35 : vector<128x128xf32>
      %c1_24 = arith.constant 1 : index
      %c0_25 = arith.constant 0 : index
      %c0_26 = arith.constant 0 : index
      %37 = vector.load %arg4[%c1_24, %c0_25, %c0_26] : memref<2x128x1xf32, #tpu.memory_space<vmem>>, vector<1x128x1xf32>
      %38 = vector.shape_cast %37 : vector<1x128x1xf32> to vector<128x1xf32>
      %39 = vector.broadcast %38 : vector<128x1xf32> to vector<128x128xf32>
      %40 = arith.subf %36, %39 : vector<128x128xf32>
      %c1_27 = arith.constant 1 : index
      %c0_28 = arith.constant 0 : index
      %c0_29 = arith.constant 0 : index
      %41 = vector.load %arg5[%c1_27, %c0_28, %c0_29] : memref<2x1x128xf32, #tpu.memory_space<vmem>>, vector<1x1x128xf32>
      %42 = vector.shape_cast %41 : vector<1x1x128xf32> to vector<1x128xf32>
      %43 = vector.broadcast %42 : vector<1x128xf32> to vector<128x128xf32>
      %44 = arith.subf %40, %43 : vector<128x128xf32>
      %cst_30 = arith.constant 0.000000e+00 : f32
      %45 = vector.broadcast %cst_30 : f32 to vector<128x128xf32>
      %46 = arith.minimumf %44, %45 : vector<128x128xf32>
      %47 = math.exp %46 : vector<128x128xf32>
      %48 = arith.addf %29, %47 : vector<128x128xf32>
      %c0_31 = arith.constant 0 : index
      %c0_32 = arith.constant 0 : index
      %49 = vector.load %arg6[%c0_31, %c0_32] : memref<128x128xf32, #tpu.memory_space<vmem>>, vector<128x128xf32>
      tpu.vector_store %arg6[%c0_31, %c0_32], %48 {strides = array<i32>} : memref<128x128xf32, #tpu.memory_space<vmem>>, vector<128x128xf32>,
    } else {
    }
    return
  }
  func.func @transform_0(%arg0: i32, %arg1: i32) -> (i32, i32, i32, i32) {
    %c0_i32 = arith.constant 0 : i32
    %c0_i32_0 = arith.constant 0 : i32
    %c0_i32_1 = arith.constant 0 : i32
    %c0_i32_2 = arith.constant 0 : i32
    return %c0_i32, %c0_i32_0, %arg0, %c0_i32_1 : i32, i32, i32, i32
  }
  func.func @transform_1(%arg0: i32, %arg1: i32) -> (i32, i32, i32, i32) {
    %c0_i32 = arith.constant 0 : i32
    %c0_i32_0 = arith.constant 0 : i32
    %c0_i32_1 = arith.constant 0 : i32
    %c0_i32_2 = arith.constant 0 : i32
    return %c0_i32, %c0_i32_0, %c0_i32_1, %arg1 : i32, i32, i32, i32
  }
  func.func @transform_2(%arg0: i32, %arg1: i32) -> (i32, i32, i32) {
    %c0_i32 = arith.constant 0 : i32
    %c0_i32_0 = arith.constant 0 : i32
    %c0_i32_1 = arith.constant 0 : i32
    return %c0_i32, %arg0, %c0_i32_0 : i32, i32, i32
  }
  func.func @transform_3(%arg0: i32, %arg1: i32) -> (i32, i32, i32) {
    %c0_i32 = arith.constant 0 : i32
    %c0_i32_0 = arith.constant 0 : i32
    %c0_i32_1 = arith.constant 0 : i32
    return %c0_i32, %c0_i32_0, %arg1 : i32, i32, i32
  }
  func.func @transform_4(%arg0: i32, %arg1: i32) -> (i32, i32) {
    %c0_i32 = arith.constant 0 : i32
    return %arg0, %arg1 : i32, i32
  }
}

</mosaic_0001>

<llo_original>
// kernel: tpu_custom_call.1
$region0: #{tpu_custom_call.1}
  #allocation0 [shape = 'u32[]', space=smem, size = 0x4, offset = 0x4, fixed_abs, tag = 'smem constant byte address 0x4 - core index']
  #allocation1 [shape = 'u32[144,128]{1,0:T(1,128)}', space=vmem, size = 0x12000, scoped, tag = 'internal scratch']
  %s0 = inlined_call_operand.vmem [shape: f32[2,1,384,1], index: 0, kind: input, shape index: {}]
  %s1 = inlined_call_operand.vmem [shape: f32[2,1,1,384], index: 1, kind: input, shape index: {}]
  %s2 = inlined_call_operand.vmem [shape: f32[2,384,1], index: 2, kind: input, shape index: {}]
  %s3 = inlined_call_operand.vmem [shape: f32[2,1,384], index: 3, kind: input, shape index: {}]
  %s4 = inlined_call_operand.hbm [shape: f32[384,384], index: 4, kind: output, shape index: {}]
  %s5 = sld [smem:[#allocation0]]
  $region201: #{tpu_custom_call.1} parent=0
    _
  %s7 = ssub.s32 1, %s5
  %s8 = scalar_select 0, %s7, %s5
  $region1: #{tpu_custom_call.1} parent=0
    #allocation2 [shape = 'u8[262144]{0}', space=vmem, size = 0x40000, scoped, tag = 'input window, operand 0']
    #allocation3 [shape = 'u8[2048]{0}', space=vmem, size = 0x800, scoped, tag = 'input window, operand 1']
    #allocation4 [shape = 'u8[262144]{0}', space=vmem, size = 0x40000, scoped, tag = 'input window, operand 2']
    #allocation5 [shape = 'u8[2048]{0}', space=vmem, size = 0x800, scoped, tag = 'input window, operand 3']
    #allocation6 [shape = 'u8[131072]{0}', space=vmem, size = 0x20000, scoped, tag = 'output window, operand 0']
    #allocation7 [shape = 's32[2]{0}', space=sflag, size = 0x8, scoped, tag = 'scoped memory for tpu_custom_call.1']
    %9 = vsyncpa [#allocation7], 0
    %s10 = scalar_lea.sflag [#allocation7], 1
    %11 = vsyncpa %s10, 0
    loop: start=0, step=1, limit=11
    $region2: #{tpu_custom_call.1} parent=1 // loop_pre_header
      _
    $region3: #{tpu_custom_call.1} parent=1 // loop_header
      %s13 = sphi 0, %s17
      %p14 = scmp.ge.s32.totalorder %s13, 11
      %s20 = sphi 0, %s32
      %s21 = sphi 0, %s28
      %s22 = sphi 0, %s20
      %s23 = sphi 0, %s21
      %s24 = sphi 0, %s22
      %s25 = sphi 0, %s23
      %s35 = sphi 0, %s37
      %s38 = sphi 0, %s35
      %s39 = sphi 0, %s38
      %s55 = sphi 0, %s39
      %s61 = sphi 0, %s63
      %s64 = sphi 0, %s61
      %s65 = sphi 0, %s64
      %s81 = sphi 0, %s65
      %s87 = sphi 0, %s89
      %s90 = sphi 0, %s87
      %s91 = sphi 0, %s90
      %s107 = sphi 0, %s91
      %s113 = sphi 0, %s115
      %s116 = sphi 0, %s113
      %s117 = sphi 0, %s116
      %s133 = sphi 0, %s117
      %s141 = sphi 0, %s143
      %s144 = sphi 0, %s141
      %s145 = sphi 0, %s144
      %s161 = sphi 0, %s145
    $region4: #{tpu_custom_call.1} parent=1 // loop_header_branch
      %16 = sbr.rel (%p14) target = $region8
    $region5: #{tpu_custom_call.1} parent=1 // loop_body
      %s18 = ssub.s32 %s13, 1
      %s19 = ssub.s32 %s13, 2
      %s26 = sadd.s32 1, %s21
      %p27 = scmp.ge.s32.totalorder %s26, 3
      %s28 = scalar_select %p27, 0, %s26
      %s29 = sadd.s32 1, %s20
      %s30 = scalar_select %p27, %s29, %s20
      %p31 = scmp.ge.s32.totalorder %s30, 3
      %s32 = scalar_select %p31, 0, %s30
      %s33 = ssub.s32 %s20, %s32
      %p34 = scmp.eq.s32.totalorder %s33, 0
      %s36 = sadd.s32 %s35, 1
      %s37 = scalar_select %p34, %s35, %s36
      %p40 = pneg %p34
      %p41 = scmp.eq.s32.totalorder %s13, 8
      %p42 = por %p40, %p41
      %p43 = scmp.ne.s32.totalorder %s35, %s38
      %p44 = scmp.eq.s32.totalorder %s13, 0
      %p45 = por %p43, %p44
      %p46 = scmp.ne.s32.totalorder %s35, %s38
      %p47 = scmp.eq.s32.totalorder %s18, 8
      %p48 = por %p46, %p47
      %p49 = scmp.ne.s32.totalorder %s38, %s39
      %p50 = scmp.eq.s32.totalorder %s18, 0
      %p51 = por %p49, %p50
      %p52 = scmp.ne.s32.totalorder %s38, %s39
      %p53 = scmp.eq.s32.totalorder %s19, 8
      %p54 = por %p52, %p53
      %p56 = scmp.ne.s32.totalorder %s39, %s55
      %p57 = scmp.eq.s32.totalorder %s19, 0
      %p58 = por %p56, %p57
      %s59 = ssub.s32 %s21, %s28
      %p60 = scmp.eq.s32.totalorder %s59, 0
      %s62 = sadd.s32 %s61, 1
      %s63 = scalar_select %p60, %s61, %s62
      %p66 = pneg %p60
      %p67 = scmp.eq.s32.totalorder %s13, 8
      %p68 = por %p66, %p67
      %p69 = scmp.ne.s32.totalorder %s61, %s64
      %p70 = scmp.eq.s32.totalorder %s13, 0
      %p71 = por %p69, %p70
      %p72 = scmp.ne.s32.totalorder %s61, %s64
      %p73 = scmp.eq.s32.totalorder %s18, 8
      %p74 = por %p72, %p73
      %p75 = scmp.ne.s32.totalorder %s64, %s65
      %p76 = scmp.eq.s32.totalorder %s18, 0
      %p77 = por %p75, %p76
      %p78 = scmp.ne.s32.totalorder %s64, %s65
      %p79 = scmp.eq.s32.totalorder %s19, 8
      %p80 = por %p78, %p79
      %p82 = scmp.ne.s32.totalorder %s65, %s81
      %p83 = scmp.eq.s32.totalorder %s19, 0
      %p84 = por %p82, %p83
      %s85 = ssub.s32 %s20, %s32
      %p86 = scmp.eq.s32.totalorder %s85, 0
      %s88 = sadd.s32 %s87, 1
      %s89 = scalar_select %p86, %s87, %s88
      %p92 = pneg %p86
      %p93 = scmp.eq.s32.totalorder %s13, 8
      %p94 = por %p92, %p93
      %p95 = scmp.ne.s32.totalorder %s87, %s90
      %p96 = scmp.eq.s32.totalorder %s13, 0
      %p97 = por %p95, %p96
      %p98 = scmp.ne.s32.totalorder %s87, %s90
      %p99 = scmp.eq.s32.totalorder %s18, 8
      %p100 = por %p98, %p99
      %p101 = scmp.ne.s32.totalorder %s90, %s91
      %p102 = scmp.eq.s32.totalorder %s18, 0
      %p103 = por %p101, %p102
      %p104 = scmp.ne.s32.totalorder %s90, %s91
      %p105 = scmp.eq.s32.totalorder %s19, 8
      %p106 = por %p104, %p105
      %p108 = scmp.ne.s32.totalorder %s91, %s107
      %p109 = scmp.eq.s32.totalorder %s19, 0
      %p110 = por %p108, %p109
      %s111 = ssub.s32 %s21, %s28
      %p112 = scmp.eq.s32.totalorder %s111, 0
      %s114 = sadd.s32 %s113, 1
      %s115 = scalar_select %p112, %s113, %s114
      %p118 = pneg %p112
      %p119 = scmp.eq.s32.totalorder %s13, 8
      %p120 = por %p118, %p119
      %p121 = scmp.ne.s32.totalorder %s113, %s116
      %p122 = scmp.eq.s32.totalorder %s13, 0
      %p123 = por %p121, %p122
      %p124 = scmp.ne.s32.totalorder %s113, %s116
      %p125 = scmp.eq.s32.totalorder %s18, 8
      %p126 = por %p124, %p125
      %p127 = scmp.ne.s32.totalorder %s116, %s117
      %p128 = scmp.eq.s32.totalorder %s18, 0
      %p129 = por %p127, %p128
      %p130 = scmp.ne.s32.totalorder %s116, %s117
      %p131 = scmp.eq.s32.totalorder %s19, 8
      %p132 = por %p130, %p131
      %p134 = scmp.ne.s32.totalorder %s117, %s133
      %p135 = scmp.eq.s32.totalorder %s19, 0
      %p136 = por %p134, %p135
      %s137 = ssub.s32 %s20, %s32
      %s138 = ssub.s32 %s21, %s28
      %s139 = sor.u32 %s137, %s138
      %p140 = scmp.eq.s32.totalorder %s139, 0
      %s142 = sadd.s32 %s141, 1
      %s143 = scalar_select %p140, %s141, %s142
      %p146 = pneg %p140
      %p147 = scmp.eq.s32.totalorder %s13, 8
      %p148 = por %p146, %p147
      %p149 = scmp.ne.s32.totalorder %s141, %s144
      %p150 = scmp.eq.s32.totalorder %s13, 0
      %p151 = por %p149, %p150
      %p152 = scmp.ne.s32.totalorder %s141, %s144
      %p153 = scmp.eq.s32.totalorder %s18, 8
      %p154 = por %p152, %p153
      %p155 = scmp.ne.s32.totalorder %s144, %s145
      %p156 = scmp.eq.s32.totalorder %s18, 0
      %p157 = por %p155, %p156
      %p158 = scmp.ne.s32.totalorder %s144, %s145
      %p159 = scmp.eq.s32.totalorder %s19, 8
      %p160 = por %p158, %p159
      %p162 = scmp.ne.s32.totalorder %s145, %s161
      %p163 = scmp.eq.s32.totalorder %s19, 0
      %p164 = por %p162, %p163
      %p165 = scmp.le.s32.totalorder 1, %s13
      %p166 = scmp.lt.s32.totalorder %s13, 10
      %p167 = pnand %p165, %p166
      %p168 = pneg %p167
      // Predicated region
      $region9: #{tpu_custom_call.1} parent=5 // pred_check
        _
      $region10: #{tpu_custom_call.1} parent=5 // pred_check_branch
        %170 = sbr.rel (%p167) target = $region12
      $region11: #{tpu_custom_call.1} parent=5 // pred_region
        %s171 = ssub.s32 %s13, 1
      $region12: #{tpu_custom_call.1} parent=5 // pred_fallthru
        _
      %p172 = scmp.lt.s32.totalorder %s13, 9
      // Predicated region
      $region13: #{tpu_custom_call.1} parent=5 // pred_check
        %p173 = pneg %p172
      $region14: #{tpu_custom_call.1} parent=5 // pred_check_branch
        %175 = sbr.rel (%p173) target = $region16
      $region15: #{tpu_custom_call.1} parent=5 // pred_region
        // Predicated region
        $region17: #{tpu_custom_call.1} parent=15 // pred_check
          %p176 = pneg %p45
        $region18: #{tpu_custom_call.1} parent=15 // pred_check_branch
          %178 = sbr.rel (%p176) target = $region20
        $region19: #{tpu_custom_call.1} parent=15 // pred_region
          %s179 = sand.u32 %s35, 1
          %s180 = sand.u32 %s35, 1
          %s181 = smul.addr %s180, 256
          %s182 = scalar_lea.vmem [#allocation2], %s181
          %s183 = smul.u32 16, %s20
          %s184 = smul.addr %s183, 8
          %s185 = scalar_lea.vmem %s0, %s184
          // Predicated region
          $region21: #{tpu_custom_call.1} parent=19 // pred_check
            _
          $region22: #{tpu_custom_call.1} parent=19 // pred_check_branch
            %187 = sbr.rel (0) target = $region24
          $region23: #{tpu_custom_call.1} parent=19 // pred_region
            // Predicated region
            $region25: #{tpu_custom_call.1} parent=23 // pred_check
              _
            $region26: #{tpu_custom_call.1} parent=23 // pred_check_branch
              %189 = sbr.rel (0) target = $region28
            $region27: #{tpu_custom_call.1} parent=23 // pred_region
              // Predicated region
              $region40: #{tpu_custom_call.1} parent=27 // pred_check
                _
              $region41: #{tpu_custom_call.1} parent=27 // pred_check_branch
                %267 = sbr.rel (0) target = $region43
              $region42: #{tpu_custom_call.1} parent=27 // pred_region
                loop: start=0, step=1, limit=1
                $region44: #{tpu_custom_call.1} parent=42 // loop_pre_header
                  _
                $region45: #{tpu_custom_call.1} parent=42 // loop_header
                  %s269 = sphi 0, %s273
                  %p270 = scmp.ge.s32.totalorder %s269, 1
                  %s274 = sphi %s185, %s185
                  %s275 = sphi %s182, %s182
                $region46: #{tpu_custom_call.1} parent=42 // loop_header_branch
                  %272 = sbr.rel (%p270) target = $region50
                $region47: #{tpu_custom_call.1} parent=42 // loop_body
                  %v276 = vld [vmem:[%s274] sm:$0xff]
                  %277 = vst [vmem:[%s275] sm:$0xff] %v276
                  %v278 = vld [vmem:[%s274 + $0x8] sm:$0xff]
                  %279 = vst [vmem:[%s275 + $0x8] sm:$0xff] %v278
                  %v280 = vld [vmem:[%s274 + $0x10] sm:$0xff]
                  %281 = vst [vmem:[%s275 + $0x10] sm:$0xff] %v280
                  %v282 = vld [vmem:[%s274 + $0x18] sm:$0xff]
                  %283 = vst [vmem:[%s275 + $0x18] sm:$0xff] %v282
                  %v284 = vld [vmem:[%s274 + $0x20] sm:$0xff]
                  %285 = vst [vmem:[%s275 + $0x20] sm:$0xff] %v284
                  %v286 = vld [vmem:[%s274 + $0x28] sm:$0xff]
                  %287 = vst [vmem:[%s275 + $0x28] sm:$0xff] %v286
                  %v288 = vld [vmem:[%s274 + $0x30] sm:$0xff]
                  %289 = vst [vmem:[%s275 + $0x30] sm:$0xff] %v288
                  %v290 = vld [vmem:[%s274 + $0x38] sm:$0xff]
                  %291 = vst [vmem:[%s275 + $0x38] sm:$0xff] %v290
                  %v292 = vld [vmem:[%s274 + $0x40] sm:$0xff]
                  %293 = vst [vmem:[%s275 + $0x40] sm:$0xff] %v292
                  %v294 = vld [vmem:[%s274 + $0x48] sm:$0xff]
                  %295 = vst [vmem:[%s275 + $0x48] sm:$0xff] %v294
                  %v296 = vld [vmem:[%s274 + $0x50] sm:$0xff]
                  %297 = vst [vmem:[%s275 + $0x50] sm:$0xff] %v296
                  %v298 = vld [vmem:[%s274 + $0x58] sm:$0xff]
                  %299 = vst [vmem:[%s275 + $0x58] sm:$0xff] %v298
                  %v300 = vld [vmem:[%s274 + $0x60] sm:$0xff]
                  %301 = vst [vmem:[%s275 + $0x60] sm:$0xff] %v300
                  %v302 = vld [vmem:[%s274 + $0x68] sm:$0xff]
                  %303 = vst [vmem:[%s275 + $0x68] sm:$0xff] %v302
                  %v304 = vld [vmem:[%s274 + $0x70] sm:$0xff]
                  %305 = vst [vmem:[%s275 + $0x70] sm:$0xff] %v304
                  %v306 = vld [vmem:[%s274 + $0x78] sm:$0xff]
                  %307 = vst [vmem:[%s275 + $0x78] sm:$0xff] %v306
                  %v308 = vld [vmem:[%s274 + $0x180] sm:$0xff]
                  %309 = vst [vmem:[%s275 + $0x80] sm:$0xff] %v308
                  %v310 = vld [vmem:[%s274 + $0x188] sm:$0xff]
                  %311 = vst [vmem:[%s275 + $0x88] sm:$0xff] %v310
                  %v312 = vld [vmem:[%s274 + $0x190] sm:$0xff]
                  %313 = vst [vmem:[%s275 + $0x90] sm:$0xff] %v312
                  %v314 = vld [vmem:[%s274 + $0x198] sm:$0xff]
                  %315 = vst [vmem:[%s275 + $0x98] sm:$0xff] %v314
                  %v316 = vld [vmem:[%s274 + $0x1a0] sm:$0xff]
                  %317 = vst [vmem:[%s275 + $0xa0] sm:$0xff] %v316
                  %v318 = vld [vmem:[%s274 + $0x1a8] sm:$0xff]
                  %319 = vst [vmem:[%s275 + $0xa8] sm:$0xff] %v318
                  %v320 = vld [vmem:[%s274 + $0x1b0] sm:$0xff]
                  %321 = vst [vmem:[%s275 + $0xb0] sm:$0xff] %v320
                  %v322 = vld [vmem:[%s274 + $0x1b8] sm:$0xff]
                  %323 = vst [vmem:[%s275 + $0xb8] sm:$0xff] %v322
                  %v324 = vld [vmem:[%s274 + $0x1c0] sm:$0xff]
                  %325 = vst [vmem:[%s275 + $0xc0] sm:$0xff] %v324
                  %v326 = vld [vmem:[%s274 + $0x1c8] sm:$0xff]
                  %327 = vst [vmem:[%s275 + $0xc8] sm:$0xff] %v326
                  %v328 = vld [vmem:[%s274 + $0x1d0] sm:$0xff]
                  %329 = vst [vmem:[%s275 + $0xd0] sm:$0xff] %v328
                  %v330 = vld [vmem:[%s274 + $0x1d8] sm:$0xff]
                  %331 = vst [vmem:[%s275 + $0xd8] sm:$0xff] %v330
                  %v332 = vld [vmem:[%s274 + $0x1e0] sm:$0xff]
                  %333 = vst [vmem:[%s275 + $0xe0] sm:$0xff] %v332
                  %v334 = vld [vmem:[%s274 + $0x1e8] sm:$0xff]
                  %335 = vst [vmem:[%s275 + $0xe8] sm:$0xff] %v334
                  %v336 = vld [vmem:[%s274 + $0x1f0] sm:$0xff]
                  %337 = vst [vmem:[%s275 + $0xf0] sm:$0xff] %v336
                  %v338 = vld [vmem:[%s274 + $0x1f8] sm:$0xff]
                  %339 = vst [vmem:[%s275 + $0xf8] sm:$0xff] %v338
                $region48: #{tpu_custom_call.1} parent=42 // loop_footer
                  %s273 = sadd.s32 1, %s269
                $region49: #{tpu_custom_call.1} parent=42 // loop_footer_branch
                  %268 = sbr.rel target = $region45
                $region50: #{tpu_custom_call.1} parent=42 // loop_exit
                  _
              $region43: #{tpu_custom_call.1} parent=27 // pred_fallthru
                _
              // Predicated region
              $region51: #{tpu_custom_call.1} parent=27 // pred_check
                _
              $region52: #{tpu_custom_call.1} parent=27 // pred_check_branch
                %341 = sbr.rel target = $region54
              $region53: #{tpu_custom_call.1} parent=27 // pred_region
                _
              $region54: #{tpu_custom_call.1} parent=27 // pred_fallthru
                _
            $region28: #{tpu_custom_call.1} parent=23 // pred_fallthru
              _
            // Predicated region
            $region29: #{tpu_custom_call.1} parent=23 // pred_check
              _
            $region30: #{tpu_custom_call.1} parent=23 // pred_check_branch
              %191 = sbr.rel target = $region32
            $region31: #{tpu_custom_call.1} parent=23 // pred_region
              %s193 = ssub.s32 256, 1
              loop: start=0, step=1, limit=1
              $region33: #{tpu_custom_call.1} parent=31 // loop_pre_header
                _
              $region34: #{tpu_custom_call.1} parent=31 // loop_header
                %s195 = sphi 0, %s199
                %p196 = scmp.ge.s32.totalorder %s195, 1
                %s200 = sphi %s185, %s185
                %s201 = sphi %s182, %s182
              $region35: #{tpu_custom_call.1} parent=31 // loop_header_branch
                %198 = sbr.rel (%p196) target = $region39
              $region36: #{tpu_custom_call.1} parent=31 // loop_body
                %v202 = vld [vmem:[%s200] sm:%s193]
                %203 = vst [vmem:[%s201] sm:%s193] %v202
                %v204 = vld [vmem:[%s200 + $0x8] sm:%s193]
                %205 = vst [vmem:[%s201 + $0x8] sm:%s193] %v204
                %v206 = vld [vmem:[%s200 + $0x10] sm:%s193]
                %207 = vst [vmem:[%s201 + $0x10] sm:%s193] %v206
                %v208 = vld [vmem:[%s200 + $0x18] sm:%s193]
                %209 = vst [vmem:[%s201 + $0x18] sm:%s193] %v208
                %v210 = vld [vmem:[%s200 + $0x20] sm:%s193]
                %211 = vst [vmem:[%s201 + $0x20] sm:%s193] %v210
                %v212 = vld [vmem:[%s200 + $0x28] sm:%s193]
                %213 = vst [vmem:[%s201 + $0x28] sm:%s193] %v212
                %v214 = vld [vmem:[%s200 + $0x30] sm:%s193]
                %215 = vst [vmem:[%s201 + $0x30] sm:%s193] %v214
                %v216 = vld [vmem:[%s200 + $0x38] sm:%s193]
                %217 = vst [vmem:[%s201 + $0x38] sm:%s193] %v216
                %v218 = vld [vmem:[%s200 + $0x40] sm:%s193]
                %219 = vst [vmem:[%s201 + $0x40] sm:%s193] %v218
                %v220 = vld [vmem:[%s200 + $0x48] sm:%s193]
                %221 = vst [vmem:[%s201 + $0x48] sm:%s193] %v220
                %v222 = vld [vmem:[%s200 + $0x50] sm:%s193]
                %223 = vst [vmem:[%s201 + $0x50] sm:%s193] %v222
                %v224 = vld [vmem:[%s200 + $0x58] sm:%s193]
                %225 = vst [vmem:[%s201 + $0x58] sm:%s193] %v224
                %v226 = vld [vmem:[%s200 + $0x60] sm:%s193]
                %227 = vst [vmem:[%s201 + $0x60] sm:%s193] %v226
                %v228 = vld [vmem:[%s200 + $0x68] sm:%s193]
                %229 = vst [vmem:[%s201 + $0x68] sm:%s193] %v228
                %v230 = vld [vmem:[%s200 + $0x70] sm:%s193]
                %231 = vst [vmem:[%s201 + $0x70] sm:%s193] %v230
                %v232 = vld [vmem:[%s200 + $0x78] sm:%s193]
                %233 = vst [vmem:[%s201 + $0x78] sm:%s193] %v232
                %v234 = vld [vmem:[%s200 + $0x180] sm:%s193]
                %235 = vst [vmem:[%s201 + $0x80] sm:%s193] %v234
                %v236 = vld [vmem:[%s200 + $0x188] sm:%s193]
                %237 = vst [vmem:[%s201 + $0x88] sm:%s193] %v236
                %v238 = vld [vmem:[%s200 + $0x190] sm:%s193]
                %239 = vst [vmem:[%s201 + $0x90] sm:%s193] %v238
                %v240 = vld [vmem:[%s200 + $0x198] sm:%s193]
                %241 = vst [vmem:[%s201 + $0x98] sm:%s193] %v240
                %v242 = vld [vmem:[%s200 + $0x1a0] sm:%s193]
                %243 = vst [vmem:[%s201 + $0xa0] sm:%s193] %v242
                %v244 = vld [vmem:[%s200 + $0x1a8] sm:%s193]
                %245 = vst [vmem:[%s201 + $0xa8] sm:%s193] %v244
                %v246 = vld [vmem:[%s200 + $0x1b0] sm:%s193]
                %247 = vst [vmem:[%s201 + $0xb0] sm:%s193] %v246
                %v248 = vld [vmem:[%s200 + $0x1b8] sm:%s193]
                %249 = vst [vmem:[%s201 + $0xb8] sm:%s193] %v248
                %v250 = vld [vmem:[%s200 + $0x1c0] sm:%s193]
                %251 = vst [vmem:[%s201 + $0xc0] sm:%s193] %v250
                %v252 = vld [vmem:[%s200 + $0x1c8] sm:%s193]
                %253 = vst [vmem:[%s201 + $0xc8] sm:%s193] %v252
                %v254 = vld [vmem:[%s200 + $0x1d0] sm:%s193]
                %255 = vst [vmem:[%s201 + $0xd0] sm:%s193] %v254
                %v256 = vld [vmem:[%s200 + $0x1d8] sm:%s193]
                %257 = vst [vmem:[%s201 + $0xd8] sm:%s193] %v256
                %v258 = vld [vmem:[%s200 + $0x1e0] sm:%s193]
                %259 = vst [vmem:[%s201 + $0xe0] sm:%s193] %v258
                %v260 = vld [vmem:[%s200 + $0x1e8] sm:%s193]
                %261 = vst [vmem:[%s201 + $0xe8] sm:%s193] %v260
                %v262 = vld [vmem:[%s200 + $0x1f0] sm:%s193]
                %263 = vst [vmem:[%s201 + $0xf0] sm:%s193] %v262
                %v264 = vld [vmem:[%s200 + $0x1f8] sm:%s193]
                %265 = vst [vmem:[%s201 + $0xf8] sm:%s193] %v264
              $region37: #{tpu_custom_call.1} parent=31 // loop_footer
                %s199 = sadd.s32 1, %s195
              $region38: #{tpu_custom_call.1} parent=31 // loop_footer_branch
                %194 = sbr.rel target = $region34
              $region39: #{tpu_custom_call.1} parent=31 // loop_exit
                _
            $region32: #{tpu_custom_call.1} parent=23 // pred_fallthru
              _
          $region24: #{tpu_custom_call.1} parent=19 // pred_fallthru
            _
          %342 = vnop
        $region20: #{tpu_custom_call.1} parent=15 // pred_fallthru
          _
        // Predicated region
        $region55: #{tpu_custom_call.1} parent=15 // pred_check
          %p343 = pneg %p71
        $region56: #{tpu_custom_call.1} parent=15 // pred_check_branch
          %345 = sbr.rel (%p343) target = $region58
        $region57: #{tpu_custom_call.1} parent=15 // pred_region
          %s346 = sand.u32 %s61, 1
          %s347 = sand.u32 %s61, 1
          %s348 = smul.addr %s347, 2
          %s349 = scalar_lea.vmem [#allocation3], %s348
          %s350 = scalar_lea.vmem %s1, %s21
          // Predicated region
          $region59: #{tpu_custom_call.1} parent=57 // pred_check
            _
          $region60: #{tpu_custom_call.1} parent=57 // pred_check_branch
            %352 = sbr.rel (0) target = $region62
          $region61: #{tpu_custom_call.1} parent=57 // pred_region
            // Predicated region
            $region63: #{tpu_custom_call.1} parent=61 // pred_check
              _
            $region64: #{tpu_custom_call.1} parent=61 // pred_check_branch
              %354 = sbr.rel target = $region66
            $region65: #{tpu_custom_call.1} parent=61 // pred_region
              // Predicated region
              $region78: #{tpu_custom_call.1} parent=65 // pred_check
                _
              $region79: #{tpu_custom_call.1} parent=65 // pred_check_branch
                %372 = sbr.rel (0) target = $region81
              $region80: #{tpu_custom_call.1} parent=65 // pred_region
                %s374 = ssub.s32 2, 1
                loop: start=0, step=1, limit=1
                $region82: #{tpu_custom_call.1} parent=80 // loop_pre_header
                  _
                $region83: #{tpu_custom_call.1} parent=80 // loop_header
                  %s376 = sphi 0, %s380
                  %p377 = scmp.ge.s32.totalorder %s376, 1
                  %s381 = sphi %s350, %s350
                  %s382 = sphi %s349, %s349
                $region84: #{tpu_custom_call.1} parent=80 // loop_header_branch
                  %379 = sbr.rel (%p377) target = $region88
                $region85: #{tpu_custom_call.1} parent=80 // loop_body
                  %v383 = vld [vmem:[%s381] sm:%s374]
                  %384 = vst [vmem:[%s382] sm:%s374] %v383
                  %v385 = vld [vmem:[%s381 + $0x3] sm:%s374]
                  %386 = vst [vmem:[%s382 + $0x1] sm:%s374] %v385
                $region86: #{tpu_custom_call.1} parent=80 // loop_footer
                  %s380 = sadd.s32 1, %s376
                $region87: #{tpu_custom_call.1} parent=80 // loop_footer_branch
                  %375 = sbr.rel target = $region83
                $region88: #{tpu_custom_call.1} parent=80 // loop_exit
                  _
              $region81: #{tpu_custom_call.1} parent=65 // pred_fallthru
                _
            $region66: #{tpu_custom_call.1} parent=61 // pred_fallthru
              _
            // Predicated region
            $region67: #{tpu_custom_call.1} parent=61 // pred_check
              _
            $region68: #{tpu_custom_call.1} parent=61 // pred_check_branch
              %356 = sbr.rel (0) target = $region70
            $region69: #{tpu_custom_call.1} parent=61 // pred_region
              %s358 = ssub.s32 2, 1
              loop: start=0, step=1, limit=1
              $region71: #{tpu_custom_call.1} parent=69 // loop_pre_header
                _
              $region72: #{tpu_custom_call.1} parent=69 // loop_header
                %s360 = sphi 0, %s364
                %p361 = scmp.ge.s32.totalorder %s360, 1
                %s365 = sphi %s350, %s350
                %s366 = sphi %s349, %s349
              $region73: #{tpu_custom_call.1} parent=69 // loop_header_branch
                %363 = sbr.rel (%p361) target = $region77
              $region74: #{tpu_custom_call.1} parent=69 // loop_body
                %v367 = vld [vmem:[%s365] sm:%s358]
                %368 = vst [vmem:[%s366] sm:%s358] %v367
                %v369 = vld [vmem:[%s365 + $0x3] sm:%s358]
                %370 = vst [vmem:[%s366 + $0x1] sm:%s358] %v369
              $region75: #{tpu_custom_call.1} parent=69 // loop_footer
                %s364 = sadd.s32 1, %s360
              $region76: #{tpu_custom_call.1} parent=69 // loop_footer_branch
                %359 = sbr.rel target = $region72
              $region77: #{tpu_custom_call.1} parent=69 // loop_exit
                _
            $region70: #{tpu_custom_call.1} parent=61 // pred_fallthru
              _
          $region62: #{tpu_custom_call.1} parent=57 // pred_fallthru
            _
          %387 = vnop
        $region58: #{tpu_custom_call.1} parent=15 // pred_fallthru
          _
        // Predicated region
        $region89: #{tpu_custom_call.1} parent=15 // pred_check
          %p388 = pneg %p97
        $region90: #{tpu_custom_call.1} parent=15 // pred_check_branch
          %390 = sbr.rel (%p388) target = $region92
        $region91: #{tpu_custom_call.1} parent=15 // pred_region
          %s391 = sand.u32 %s87, 1
          %s392 = sand.u32 %s87, 1
          %s393 = smul.addr %s392, 256
          %s394 = scalar_lea.vmem [#allocation4], %s393
          %s395 = smul.u32 16, %s20
          %s396 = smul.addr %s395, 8
          %s397 = scalar_lea.vmem %s2, %s396
          // Predicated region
          $region93: #{tpu_custom_call.1} parent=91 // pred_check
            _
          $region94: #{tpu_custom_call.1} parent=91 // pred_check_branch
            %399 = sbr.rel (0) target = $region96
          $region95: #{tpu_custom_call.1} parent=91 // pred_region
            // Predicated region
            $region97: #{tpu_custom_call.1} parent=95 // pred_check
              _
            $region98: #{tpu_custom_call.1} parent=95 // pred_check_branch
              %401 = sbr.rel (0) target = $region100
            $region99: #{tpu_custom_call.1} parent=95 // pred_region
              // Predicated region
              $region112: #{tpu_custom_call.1} parent=99 // pred_check
                _
              $region113: #{tpu_custom_call.1} parent=99 // pred_check_branch
                %479 = sbr.rel (0) target = $region115
              $region114: #{tpu_custom_call.1} parent=99 // pred_region
                loop: start=0, step=1, limit=1
                $region116: #{tpu_custom_call.1} parent=114 // loop_pre_header
                  _
                $region117: #{tpu_custom_call.1} parent=114 // loop_header
                  %s481 = sphi 0, %s485
                  %p482 = scmp.ge.s32.totalorder %s481, 1
                  %s486 = sphi %s397, %s397
                  %s487 = sphi %s394, %s394
                $region118: #{tpu_custom_call.1} parent=114 // loop_header_branch
                  %484 = sbr.rel (%p482) target = $region122
                $region119: #{tpu_custom_call.1} parent=114 // loop_body
                  %v488 = vld [vmem:[%s486] sm:$0xff]
                  %489 = vst [vmem:[%s487] sm:$0xff] %v488
                  %v490 = vld [vmem:[%s486 + $0x8] sm:$0xff]
                  %491 = vst [vmem:[%s487 + $0x8] sm:$0xff] %v490
                  %v492 = vld [vmem:[%s486 + $0x10] sm:$0xff]
                  %493 = vst [vmem:[%s487 + $0x10] sm:$0xff] %v492
                  %v494 = vld [vmem:[%s486 + $0x18] sm:$0xff]
                  %495 = vst [vmem:[%s487 + $0x18] sm:$0xff] %v494
                  %v496 = vld [vmem:[%s486 + $0x20] sm:$0xff]
                  %497 = vst [vmem:[%s487 + $0x20] sm:$0xff] %v496
                  %v498 = vld [vmem:[%s486 + $0x28] sm:$0xff]
                  %499 = vst [vmem:[%s487 + $0x28] sm:$0xff] %v498
                  %v500 = vld [vmem:[%s486 + $0x30] sm:$0xff]
                  %501 = vst [vmem:[%s487 + $0x30] sm:$0xff] %v500
                  %v502 = vld [vmem:[%s486 + $0x38] sm:$0xff]
                  %503 = vst [vmem:[%s487 + $0x38] sm:$0xff] %v502
                  %v504 = vld [vmem:[%s486 + $0x40] sm:$0xff]
                  %505 = vst [vmem:[%s487 + $0x40] sm:$0xff] %v504
                  %v506 = vld [vmem:[%s486 + $0x48] sm:$0xff]
                  %507 = vst [vmem:[%s487 + $0x48] sm:$0xff] %v506
                  %v508 = vld [vmem:[%s486 + $0x50] sm:$0xff]
                  %509 = vst [vmem:[%s487 + $0x50] sm:$0xff] %v508
                  %v510 = vld [vmem:[%s486 + $0x58] sm:$0xff]
                  %511 = vst [vmem:[%s487 + $0x58] sm:$0xff] %v510
                  %v512 = vld [vmem:[%s486 + $0x60] sm:$0xff]
                  %513 = vst [vmem:[%s487 + $0x60] sm:$0xff] %v512
                  %v514 = vld [vmem:[%s486 + $0x68] sm:$0xff]
                  %515 = vst [vmem:[%s487 + $0x68] sm:$0xff] %v514
                  %v516 = vld [vmem:[%s486 + $0x70] sm:$0xff]
                  %517 = vst [vmem:[%s487 + $0x70] sm:$0xff] %v516
                  %v518 = vld [vmem:[%s486 + $0x78] sm:$0xff]
                  %519 = vst [vmem:[%s487 + $0x78] sm:$0xff] %v518
                  %v520 = vld [vmem:[%s486 + $0x180] sm:$0xff]
                  %521 = vst [vmem:[%s487 + $0x80] sm:$0xff] %v520
                  %v522 = vld [vmem:[%s486 + $0x188] sm:$0xff]
                  %523 = vst [vmem:[%s487 + $0x88] sm:$0xff] %v522
                  %v524 = vld [vmem:[%s486 + $0x190] sm:$0xff]
                  %525 = vst [vmem:[%s487 + $0x90] sm:$0xff] %v524
                  %v526 = vld [vmem:[%s486 + $0x198] sm:$0xff]
                  %527 = vst [vmem:[%s487 + $0x98] sm:$0xff] %v526
                  %v528 = vld [vmem:[%s486 + $0x1a0] sm:$0xff]
                  %529 = vst [vmem:[%s487 + $0xa0] sm:$0xff] %v528
                  %v530 = vld [vmem:[%s486 + $0x1a8] sm:$0xff]
                  %531 = vst [vmem:[%s487 + $0xa8] sm:$0xff] %v530
                  %v532 = vld [vmem:[%s486 + $0x1b0] sm:$0xff]
                  %533 = vst [vmem:[%s487 + $0xb0] sm:$0xff] %v532
                  %v534 = vld [vmem:[%s486 + $0x1b8] sm:$0xff]
                  %535 = vst [vmem:[%s487 + $0xb8] sm:$0xff] %v534
                  %v536 = vld [vmem:[%s486 + $0x1c0] sm:$0xff]
                  %537 = vst [vmem:[%s487 + $0xc0] sm:$0xff] %v536
                  %v538 = vld [vmem:[%s486 + $0x1c8] sm:$0xff]
                  %539 = vst [vmem:[%s487 + $0xc8] sm:$0xff] %v538
                  %v540 = vld [vmem:[%s486 + $0x1d0] sm:$0xff]
                  %541 = vst [vmem:[%s487 + $0xd0] sm:$0xff] %v540
                  %v542 = vld [vmem:[%s486 + $0x1d8] sm:$0xff]
                  %543 = vst [vmem:[%s487 + $0xd8] sm:$0xff] %v542
                  %v544 = vld [vmem:[%s486 + $0x1e0] sm:$0xff]
                  %545 = vst [vmem:[%s487 + $0xe0] sm:$0xff] %v544
                  %v546 = vld [vmem:[%s486 + $0x1e8] sm:$0xff]
                  %547 = vst [vmem:[%s487 + $0xe8] sm:$0xff] %v546
                  %v548 = vld [vmem:[%s486 + $0x1f0] sm:$0xff]
                  %549 = vst [vmem:[%s487 + $0xf0] sm:$0xff] %v548
                  %v550 = vld [vmem:[%s486 + $0x1f8] sm:$0xff]
                  %551 = vst [vmem:[%s487 + $0xf8] sm:$0xff] %v550
                $region120: #{tpu_custom_call.1} parent=114 // loop_footer
                  %s485 = sadd.s32 1, %s481
                $region121: #{tpu_custom_call.1} parent=114 // loop_footer_branch
                  %480 = sbr.rel target = $region117
                $region122: #{tpu_custom_call.1} parent=114 // loop_exit
                  _
              $region115: #{tpu_custom_call.1} parent=99 // pred_fallthru
                _
              // Predicated region
              $region123: #{tpu_custom_call.1} parent=99 // pred_check
                _
              $region124: #{tpu_custom_call.1} parent=99 // pred_check_branch
                %553 = sbr.rel target = $region126
              $region125: #{tpu_custom_call.1} parent=99 // pred_region
                _
              $region126: #{tpu_custom_call.1} parent=99 // pred_fallthru
                _
            $region100: #{tpu_custom_call.1} parent=95 // pred_fallthru
              _
            // Predicated region
            $region101: #{tpu_custom_call.1} parent=95 // pred_check
              _
            $region102: #{tpu_custom_call.1} parent=95 // pred_check_branch
              %403 = sbr.rel target = $region104
            $region103: #{tpu_custom_call.1} parent=95 // pred_region
              %s405 = ssub.s32 256, 1
              loop: start=0, step=1, limit=1
              $region105: #{tpu_custom_call.1} parent=103 // loop_pre_header
                _
              $region106: #{tpu_custom_call.1} parent=103 // loop_header
                %s407 = sphi 0, %s411
                %p408 = scmp.ge.s32.totalorder %s407, 1
                %s412 = sphi %s397, %s397
                %s413 = sphi %s394, %s394
              $region107: #{tpu_custom_call.1} parent=103 // loop_header_branch
                %410 = sbr.rel (%p408) target = $region111
              $region108: #{tpu_custom_call.1} parent=103 // loop_body
                %v414 = vld [vmem:[%s412] sm:%s405]
                %415 = vst [vmem:[%s413] sm:%s405] %v414
                %v416 = vld [vmem:[%s412 + $0x8] sm:%s405]
                %417 = vst [vmem:[%s413 + $0x8] sm:%s405] %v416
                %v418 = vld [vmem:[%s412 + $0x10] sm:%s405]
                %419 = vst [vmem:[%s413 + $0x10] sm:%s405] %v418
                %v420 = vld [vmem:[%s412 + $0x18] sm:%s405]
                %421 = vst [vmem:[%s413 + $0x18] sm:%s405] %v420
                %v422 = vld [vmem:[%s412 + $0x20] sm:%s405]
                %423 = vst [vmem:[%s413 + $0x20] sm:%s405] %v422
                %v424 = vld [vmem:[%s412 + $0x28] sm:%s405]
                %425 = vst [vmem:[%s413 + $0x28] sm:%s405] %v424
                %v426 = vld [vmem:[%s412 + $0x30] sm:%s405]
                %427 = vst [vmem:[%s413 + $0x30] sm:%s405] %v426
                %v428 = vld [vmem:[%s412 + $0x38] sm:%s405]
                %429 = vst [vmem:[%s413 + $0x38] sm:%s405] %v428
                %v430 = vld [vmem:[%s412 + $0x40] sm:%s405]
                %431 = vst [vmem:[%s413 + $0x40] sm:%s405] %v430
                %v432 = vld [vmem:[%s412 + $0x48] sm:%s405]
                %433 = vst [vmem:[%s413 + $0x48] sm:%s405] %v432
                %v434 = vld [vmem:[%s412 + $0x50] sm:%s405]
                %435 = vst [vmem:[%s413 + $0x50] sm:%s405] %v434
                %v436 = vld [vmem:[%s412 + $0x58] sm:%s405]
                %437 = vst [vmem:[%s413 + $0x58] sm:%s405] %v436
                %v438 = vld [vmem:[%s412 + $0x60] sm:%s405]
                %439 = vst [vmem:[%s413 + $0x60] sm:%s405] %v438
                %v440 = vld [vmem:[%s412 + $0x68] sm:%s405]
                %441 = vst [vmem:[%s413 + $0x68] sm:%s405] %v440
                %v442 = vld [vmem:[%s412 + $0x70] sm:%s405]
                %443 = vst [vmem:[%s413 + $0x70] sm:%s405] %v442
                %v444 = vld [vmem:[%s412 + $0x78] sm:%s405]
                %445 = vst [vmem:[%s413 + $0x78] sm:%s405] %v444
                %v446 = vld [vmem:[%s412 + $0x180] sm:%s405]
                %447 = vst [vmem:[%s413 + $0x80] sm:%s405] %v446
                %v448 = vld [vmem:[%s412 + $0x188] sm:%s405]
                %449 = vst [vmem:[%s413 + $0x88] sm:%s405] %v448
                %v450 = vld [vmem:[%s412 + $0x190] sm:%s405]
                %451 = vst [vmem:[%s413 + $0x90] sm:%s405] %v450
                %v452 = vld [vmem:[%s412 + $0x198] sm:%s405]
                %453 = vst [vmem:[%s413 + $0x98] sm:%s405] %v452
                %v454 = vld [vmem:[%s412 + $0x1a0] sm:%s405]
                %455 = vst [vmem:[%s413 + $0xa0] sm:%s405] %v454
                %v456 = vld [vmem:[%s412 + $0x1a8] sm:%s405]
                %457 = vst [vmem:[%s413 + $0xa8] sm:%s405] %v456
                %v458 = vld [vmem:[%s412 + $0x1b0] sm:%s405]
                %459 = vst [vmem:[%s413 + $0xb0] sm:%s405] %v458
                %v460 = vld [vmem:[%s412 + $0x1b8] sm:%s405]
                %461 = vst [vmem:[%s413 + $0xb8] sm:%s405] %v460
                %v462 = vld [vmem:[%s412 + $0x1c0] sm:%s405]
                %463 = vst [vmem:[%s413 + $0xc0] sm:%s405] %v462
                %v464 = vld [vmem:[%s412 + $0x1c8] sm:%s405]
                %465 = vst [vmem:[%s413 + $0xc8] sm:%s405] %v464
                %v466 = vld [vmem:[%s412 + $0x1d0] sm:%s405]
                %467 = vst [vmem:[%s413 + $0xd0] sm:%s405] %v466
                %v468 = vld [vmem:[%s412 + $0x1d8] sm:%s405]
                %469 = vst [vmem:[%s413 + $0xd8] sm:%s405] %v468
                %v470 = vld [vmem:[%s412 + $0x1e0] sm:%s405]
                %471 = vst [vmem:[%s413 + $0xe0] sm:%s405] %v470
                %v472 = vld [vmem:[%s412 + $0x1e8] sm:%s405]
                %473 = vst [vmem:[%s413 + $0xe8] sm:%s405] %v472
                %v474 = vld [vmem:[%s412 + $0x1f0] sm:%s405]
                %475 = vst [vmem:[%s413 + $0xf0] sm:%s405] %v474
                %v476 = vld [vmem:[%s412 + $0x1f8] sm:%s405]
                %477 = vst [vmem:[%s413 + $0xf8] sm:%s405] %v476
              $region109: #{tpu_custom_call.1} parent=103 // loop_footer
                %s411 = sadd.s32 1, %s407
              $region110: #{tpu_custom_call.1} parent=103 // loop_footer_branch
                %406 = sbr.rel target = $region106
              $region111: #{tpu_custom_call.1} parent=103 // loop_exit
                _
            $region104: #{tpu_custom_call.1} parent=95 // pred_fallthru
              _
          $region96: #{tpu_custom_call.1} parent=91 // pred_fallthru
            _
          %554 = vnop
        $region92: #{tpu_custom_call.1} parent=15 // pred_fallthru
          _
        // Predicated region
        $region127: #{tpu_custom_call.1} parent=15 // pred_check
          %p555 = pneg %p123
        $region128: #{tpu_custom_call.1} parent=15 // pred_check_branch
          %557 = sbr.rel (%p555) target = $region130
        $region129: #{tpu_custom_call.1} parent=15 // pred_region
          %s558 = sand.u32 %s113, 1
          %s559 = sand.u32 %s113, 1
          %s560 = smul.addr %s559, 2
          %s561 = scalar_lea.vmem [#allocation5], %s560
          %s562 = scalar_lea.vmem %s3, %s21
          // Predicated region
          $region131: #{tpu_custom_call.1} parent=129 // pred_check
            _
          $region132: #{tpu_custom_call.1} parent=129 // pred_check_branch
            %564 = sbr.rel (0) target = $region134
          $region133: #{tpu_custom_call.1} parent=129 // pred_region
            // Predicated region
            $region135: #{tpu_custom_call.1} parent=133 // pred_check
              _
            $region136: #{tpu_custom_call.1} parent=133 // pred_check_branch
              %566 = sbr.rel target = $region138
            $region137: #{tpu_custom_call.1} parent=133 // pred_region
              // Predicated region
              $region150: #{tpu_custom_call.1} parent=137 // pred_check
                _
              $region151: #{tpu_custom_call.1} parent=137 // pred_check_branch
                %584 = sbr.rel (0) target = $region153
              $region152: #{tpu_custom_call.1} parent=137 // pred_region
                %s586 = ssub.s32 2, 1
                loop: start=0, step=1, limit=1
                $region154: #{tpu_custom_call.1} parent=152 // loop_pre_header
                  _
                $region155: #{tpu_custom_call.1} parent=152 // loop_header
                  %s588 = sphi 0, %s592
                  %p589 = scmp.ge.s32.totalorder %s588, 1
                  %s593 = sphi %s562, %s562
                  %s594 = sphi %s561, %s561
                $region156: #{tpu_custom_call.1} parent=152 // loop_header_branch
                  %591 = sbr.rel (%p589) target = $region160
                $region157: #{tpu_custom_call.1} parent=152 // loop_body
                  %v595 = vld [vmem:[%s593] sm:%s586]
                  %596 = vst [vmem:[%s594] sm:%s586] %v595
                  %v597 = vld [vmem:[%s593 + $0x3] sm:%s586]
                  %598 = vst [vmem:[%s594 + $0x1] sm:%s586] %v597
                $region158: #{tpu_custom_call.1} parent=152 // loop_footer
                  %s592 = sadd.s32 1, %s588
                $region159: #{tpu_custom_call.1} parent=152 // loop_footer_branch
                  %587 = sbr.rel target = $region155
                $region160: #{tpu_custom_call.1} parent=152 // loop_exit
                  _
              $region153: #{tpu_custom_call.1} parent=137 // pred_fallthru
                _
            $region138: #{tpu_custom_call.1} parent=133 // pred_fallthru
              _
            // Predicated region
            $region139: #{tpu_custom_call.1} parent=133 // pred_check
              _
            $region140: #{tpu_custom_call.1} parent=133 // pred_check_branch
              %568 = sbr.rel (0) target = $region142
            $region141: #{tpu_custom_call.1} parent=133 // pred_region
              %s570 = ssub.s32 2, 1
              loop: start=0, step=1, limit=1
              $region143: #{tpu_custom_call.1} parent=141 // loop_pre_header
                _
              $region144: #{tpu_custom_call.1} parent=141 // loop_header
                %s572 = sphi 0, %s576
                %p573 = scmp.ge.s32.totalorder %s572, 1
                %s577 = sphi %s562, %s562
                %s578 = sphi %s561, %s561
              $region145: #{tpu_custom_call.1} parent=141 // loop_header_branch
                %575 = sbr.rel (%p573) target = $region149
              $region146: #{tpu_custom_call.1} parent=141 // loop_body
                %v579 = vld [vmem:[%s577] sm:%s570]
                %580 = vst [vmem:[%s578] sm:%s570] %v579
                %v581 = vld [vmem:[%s577 + $0x3] sm:%s570]
                %582 = vst [vmem:[%s578 + $0x1] sm:%s570] %v581
              $region147: #{tpu_custom_call.1} parent=141 // loop_footer
                %s576 = sadd.s32 1, %s572
              $region148: #{tpu_custom_call.1} parent=141 // loop_footer_branch
                %571 = sbr.rel target = $region144
              $region149: #{tpu_custom_call.1} parent=141 // loop_exit
                _
            $region142: #{tpu_custom_call.1} parent=133 // pred_fallthru
              _
          $region134: #{tpu_custom_call.1} parent=129 // pred_fallthru
            _
          %599 = vnop
        $region130: #{tpu_custom_call.1} parent=15 // pred_fallthru
          _
      $region16: #{tpu_custom_call.1} parent=5 // pred_fallthru
        _
      %p600 = scmp.le.s32.totalorder 1, %s13
      %p601 = scmp.lt.s32.totalorder %s13, 10
      %p602 = pnand %p600, %p601
      %p603 = pneg %p602
      // Predicated region
      $region161: #{tpu_custom_call.1} parent=5 // pred_check
        _
      $region162: #{tpu_custom_call.1} parent=5 // pred_check_branch
        %605 = sbr.rel (%p602) target = $region164
      $region163: #{tpu_custom_call.1} parent=5 // pred_region
        %s606 = ssub.s32 %s13, 1
        %s607 = sand.u32 %s38, 1
        %s608 = sand.u32 %s38, 1
        %s609 = smul.addr %s608, 256
        %s610 = scalar_lea.vmem [#allocation2], %s609
        // Predicated region
        $region165: #{tpu_custom_call.1} parent=163 // pred_check
          %p611 = pneg %p51
        $region166: #{tpu_custom_call.1} parent=163 // pred_check_branch
          %613 = sbr.rel (%p611) target = $region168
        $region167: #{tpu_custom_call.1} parent=163 // pred_region
          _
        $region168: #{tpu_custom_call.1} parent=163 // pred_fallthru
          _
        %s614 = sand.u32 %s64, 1
        %s615 = sand.u32 %s64, 1
        %s616 = smul.addr %s615, 2
        %s617 = scalar_lea.vmem [#allocation3], %s616
        // Predicated region
        $region169: #{tpu_custom_call.1} parent=163 // pred_check
          %p618 = pneg %p77
        $region170: #{tpu_custom_call.1} parent=163 // pred_check_branch
          %620 = sbr.rel (%p618) target = $region172
        $region171: #{tpu_custom_call.1} parent=163 // pred_region
          _
        $region172: #{tpu_custom_call.1} parent=163 // pred_fallthru
          _
        %s621 = sand.u32 %s90, 1
        %s622 = sand.u32 %s90, 1
        %s623 = smul.addr %s622, 256
        %s624 = scalar_lea.vmem [#allocation4], %s623
        // Predicated region
        $region173: #{tpu_custom_call.1} parent=163 // pred_check
          %p625 = pneg %p103
        $region174: #{tpu_custom_call.1} parent=163 // pred_check_branch
          %627 = sbr.rel (%p625) target = $region176
        $region175: #{tpu_custom_call.1} parent=163 // pred_region
          _
        $region176: #{tpu_custom_call.1} parent=163 // pred_fallthru
          _
        %s628 = sand.u32 %s116, 1
        %s629 = sand.u32 %s116, 1
        %s630 = smul.addr %s629, 2
        %s631 = scalar_lea.vmem [#allocation5], %s630
        // Predicated region
        $region177: #{tpu_custom_call.1} parent=163 // pred_check
          %p632 = pneg %p129
        $region178: #{tpu_custom_call.1} parent=163 // pred_check_branch
          %634 = sbr.rel (%p632) target = $region180
        $region179: #{tpu_custom_call.1} parent=163 // pred_region
          _
        $region180: #{tpu_custom_call.1} parent=163 // pred_fallthru
          _
        %s635 = sand.u32 %s38, 1
        %s636 = sand.u32 %s38, 1
        %s637 = smul.addr %s636, 256
        %s638 = scalar_lea.vmem [#allocation2], %s637
        %p639 = pneg %p51
        %p640 = pneg %p48
        %s641 = sand.u32 %s64, 1
        %s642 = sand.u32 %s64, 1
        %s643 = smul.addr %s642, 2
        %s644 = scalar_lea.vmem [#allocation3], %s643
        %p645 = pneg %p77
        %p646 = pneg %p74
        %s647 = sand.u32 %s90, 1
        %s648 = sand.u32 %s90, 1
        %s649 = smul.addr %s648, 256
        %s650 = scalar_lea.vmem [#allocation4], %s649
        %p651 = pneg %p103
        %p652 = pneg %p100
        %s653 = sand.u32 %s116, 1
        %s654 = sand.u32 %s116, 1
        %s655 = smul.addr %s654, 2
        %s656 = scalar_lea.vmem [#allocation5], %s655
        %p657 = pneg %p129
        %p658 = pneg %p126
        %p659 = pneg %p157
        %p660 = pneg %p154
        %s661 = sand.u32 %s144, 1
        %s662 = scalar_lea.sflag [#allocation7], %s661
        %s663 = sand.u32 %s144, 1
        %s664 = smul.addr %s663, 128
        %s665 = scalar_lea.vmem [#allocation6], %s664
        %s666 = smul.u32 16, %s22
        %s667 = smul.u32 16, %s22
        %s668 = smul.u32 16, %s22
        %s669 = smul.u32 %s22, 128
        %s670 = smul.u32 %s23, 128
        %s671 = sadd.s32 %s670, 128
        %p672 = scmp.lt.s32.totalorder %s669, %s671
        %s673 = sadd.s32 %s669, 128
        %p674 = scmp.lt.s32.totalorder %s670, %s673
        %p675 = pnand %p672, %p674
        %p676 = pneg %p675
        // Predicated region
        $region181: #{tpu_custom_call.1} parent=163 // pred_check
          _
        $region182: #{tpu_custom_call.1} parent=163 // pred_check_branch
          %678 = sbr.rel (%p675) target = $region184
        $region183: #{tpu_custom_call.1} parent=163 // pred_region
          %v679 = vlaneseq
          %v680 = vshrl.u32 %v679, 7
          %v681 = vadd.s32 %v680, 8
          %v682 = vadd.s32 %v680, 16
          %v683 = vadd.s32 %v680, 24
          %v684 = vadd.s32 %v680, 32
          %v685 = vadd.s32 %v680, 40
          %v686 = vadd.s32 %v680, 48
          %v687 = vadd.s32 %v680, 56
          %v688 = vadd.s32 %v680, 64
          %v689 = vadd.s32 %v680, 72
          %v690 = vadd.s32 %v680, 80
          %v691 = vadd.s32 %v680, 88
          %v692 = vadd.s32 %v680, 96
          %v693 = vadd.s32 %v680, 104
          %v694 = vadd.s32 %v680, 112
          %v695 = vadd.s32 %v680, 120
          %v696 = vstv %s669
          %v697 = vadd.s32 %v680, %v696
          %v698 = vadd.s32 %v681, %v696
          %v699 = vadd.s32 %v682, %v696
          %v700 = vadd.s32 %v683, %v696
          %v701 = vadd.s32 %v684, %v696
          %v702 = vadd.s32 %v685, %v696
          %v703 = vadd.s32 %v686, %v696
          %v704 = vadd.s32 %v687, %v696
          %v705 = vadd.s32 %v688, %v696
          %v706 = vadd.s32 %v689, %v696
          %v707 = vadd.s32 %v690, %v696
          %v708 = vadd.s32 %v691, %v696
          %v709 = vadd.s32 %v692, %v696
          %v710 = vadd.s32 %v693, %v696
          %v711 = vadd.s32 %v694, %v696
          %v712 = vadd.s32 %v695, %v696
          %v713 = vlaneseq
          %v714 = vand.u32 %v713, 127
          %v715 = vstv %s670
          %v716 = vadd.s32 %v714, %v715
          %vm717 = vcmp.eq.s32.totalorder %v697, %v716
          %vm718 = vcmp.eq.s32.totalorder %v698, %v716
          %vm719 = vcmp.eq.s32.totalorder %v699, %v716
          %vm720 = vcmp.eq.s32.totalorder %v700, %v716
          %vm721 = vcmp.eq.s32.totalorder %v701, %v716
          %vm722 = vcmp.eq.s32.totalorder %v702, %v716
          %vm723 = vcmp.eq.s32.totalorder %v703, %v716
          %vm724 = vcmp.eq.s32.totalorder %v704, %v716
          %vm725 = vcmp.eq.s32.totalorder %v705, %v716
          %vm726 = vcmp.eq.s32.totalorder %v706, %v716
          %vm727 = vcmp.eq.s32.totalorder %v707, %v716
          %vm728 = vcmp.eq.s32.totalorder %v708, %v716
          %vm729 = vcmp.eq.s32.totalorder %v709, %v716
          %vm730 = vcmp.eq.s32.totalorder %v710, %v716
          %vm731 = vcmp.eq.s32.totalorder %v711, %v716
          %vm732 = vcmp.eq.s32.totalorder %v712, %v716
          %v733 = vld [vmem:[%s610] sm:$0xff]
          %v734 = vld [vmem:[%s610 + $0x8] sm:$0xff]
          %v735 = vld [vmem:[%s610 + $0x10] sm:$0xff]
          %v736 = vld [vmem:[%s610 + $0x18] sm:$0xff]
          %v737 = vld [vmem:[%s610 + $0x20] sm:$0xff]
          %v738 = vld [vmem:[%s610 + $0x28] sm:$0xff]
          %v739 = vld [vmem:[%s610 + $0x30] sm:$0xff]
          %v740 = vld [vmem:[%s610 + $0x38] sm:$0xff]
          %v741 = vld [vmem:[%s610 + $0x40] sm:$0xff]
          %v742 = vld [vmem:[%s610 + $0x48] sm:$0xff]
          %v743 = vld [vmem:[%s610 + $0x50] sm:$0xff]
          %v744 = vld [vmem:[%s610 + $0x58] sm:$0xff]
          %v745 = vld [vmem:[%s610 + $0x60] sm:$0xff]
          %v746 = vld [vmem:[%s610 + $0x68] sm:$0xff]
          %v747 = vld [vmem:[%s610 + $0x70] sm:$0xff]
          %v748 = vld [vmem:[%s610 + $0x78] sm:$0xff]
          %v749 = vld [vmem:[%s617] sm:$0x1]
          %751 = vset.pattern.permute.xlu0 0
          %752 = vperm.xlu0 %751, %v733
          %v753 = vpop.permute.xlu0 %752
          %756 = vset.pattern.permute.xlu0 0
          %757 = vperm.xlu0 %756, %v734
          %v758 = vpop.permute.xlu0 %757
          %761 = vset.pattern.permute.xlu0 0
          %762 = vperm.xlu0 %761, %v735
          %v763 = vpop.permute.xlu0 %762
          %766 = vset.pattern.permute.xlu0 0
          %767 = vperm.xlu0 %766, %v736
          %v768 = vpop.permute.xlu0 %767
          %771 = vset.pattern.permute.xlu0 0
          %772 = vperm.xlu0 %771, %v737
          %v773 = vpop.permute.xlu0 %772
          %776 = vset.pattern.permute.xlu0 0
          %777 = vperm.xlu0 %776, %v738
          %v778 = vpop.permute.xlu0 %777
          %781 = vset.pattern.permute.xlu0 0
          %782 = vperm.xlu0 %781, %v739
          %v783 = vpop.permute.xlu0 %782
          %786 = vset.pattern.permute.xlu0 0
          %787 = vperm.xlu0 %786, %v740
          %v788 = vpop.permute.xlu0 %787
          %791 = vset.pattern.permute.xlu0 0
          %792 = vperm.xlu0 %791, %v741
          %v793 = vpop.permute.xlu0 %792
          %796 = vset.pattern.permute.xlu0 0
          %797 = vperm.xlu0 %796, %v742
          %v798 = vpop.permute.xlu0 %797
          %801 = vset.pattern.permute.xlu0 0
          %802 = vperm.xlu0 %801, %v743
          %v803 = vpop.permute.xlu0 %802
          %806 = vset.pattern.permute.xlu0 0
          %807 = vperm.xlu0 %806, %v744
          %v808 = vpop.permute.xlu0 %807
          %811 = vset.pattern.permute.xlu0 0
          %812 = vperm.xlu0 %811, %v745
          %v813 = vpop.permute.xlu0 %812
          %816 = vset.pattern.permute.xlu0 0
          %817 = vperm.xlu0 %816, %v746
          %v818 = vpop.permute.xlu0 %817
          %821 = vset.pattern.permute.xlu0 0
          %822 = vperm.xlu0 %821, %v747
          %v823 = vpop.permute.xlu0 %822
          %826 = vset.pattern.permute.xlu0 0
          %827 = vperm.xlu0 %826, %v748
          %v828 = vpop.permute.xlu0 %827
          %v831 = vlaneseq
          %v832 = vshrl.u32 %v831, 7
          %v833 = vsub.s32 0, %v832
          %v834 = vrot.slane %v749, %v833
          %v836 = vmul.f32 %v753, %v834
          %v837 = vmul.f32 %v758, %v834
          %v838 = vmul.f32 %v763, %v834
          %v839 = vmul.f32 %v768, %v834
          %v840 = vmul.f32 %v773, %v834
          %v841 = vmul.f32 %v778, %v834
          %v842 = vmul.f32 %v783, %v834
          %v843 = vmul.f32 %v788, %v834
          %v844 = vmul.f32 %v793, %v834
          %v845 = vmul.f32 %v798, %v834
          %v846 = vmul.f32 %v803, %v834
          %v847 = vmul.f32 %v808, %v834
          %v848 = vmul.f32 %v813, %v834
          %v849 = vmul.f32 %v818, %v834
          %v850 = vmul.f32 %v823, %v834
          %v851 = vmul.f32 %v828, %v834
          %v852 = vld [vmem:[%s624] sm:$0xff]
          %v853 = vld [vmem:[%s624 + $0x8] sm:$0xff]
          %v854 = vld [vmem:[%s624 + $0x10] sm:$0xff]
          %v855 = vld [vmem:[%s624 + $0x18] sm:$0xff]
          %v856 = vld [vmem:[%s624 + $0x20] sm:$0xff]
          %v857 = vld [vmem:[%s624 + $0x28] sm:$0xff]
          %v858 = vld [vmem:[%s624 + $0x30] sm:$0xff]
          %v859 = vld [vmem:[%s624 + $0x38] sm:$0xff]
          %v860 = vld [vmem:[%s624 + $0x40] sm:$0xff]
          %v861 = vld [vmem:[%s624 + $0x48] sm:$0xff]
          %v862 = vld [vmem:[%s624 + $0x50] sm:$0xff]
          %v863 = vld [vmem:[%s624 + $0x58] sm:$0xff]
          %v864 = vld [vmem:[%s624 + $0x60] sm:$0xff]
          %v865 = vld [vmem:[%s624 + $0x68] sm:$0xff]
          %v866 = vld [vmem:[%s624 + $0x70] sm:$0xff]
          %v867 = vld [vmem:[%s624 + $0x78] sm:$0xff]
          %869 = vset.pattern.permute.xlu0 0
          %870 = vperm.xlu0 %869, %v852
          %v871 = vpop.permute.xlu0 %870
          %874 = vset.pattern.permute.xlu0 0
          %875 = vperm.xlu0 %874, %v853
          %v876 = vpop.permute.xlu0 %875
          %879 = vset.pattern.permute.xlu0 0
          %880 = vperm.xlu0 %879, %v854
          %v881 = vpop.permute.xlu0 %880
          %884 = vset.pattern.permute.xlu0 0
          %885 = vperm.xlu0 %884, %v855
          %v886 = vpop.permute.xlu0 %885
          %889 = vset.pattern.permute.xlu0 0
          %890 = vperm.xlu0 %889, %v856
          %v891 = vpop.permute.xlu0 %890
          %894 = vset.pattern.permute.xlu0 0
          %895 = vperm.xlu0 %894, %v857
          %v896 = vpop.permute.xlu0 %895
          %899 = vset.pattern.permute.xlu0 0
          %900 = vperm.xlu0 %899, %v858
          %v901 = vpop.permute.xlu0 %900
          %904 = vset.pattern.permute.xlu0 0
          %905 = vperm.xlu0 %904, %v859
          %v906 = vpop.permute.xlu0 %905
          %909 = vset.pattern.permute.xlu0 0
          %910 = vperm.xlu0 %909, %v860
          %v911 = vpop.permute.xlu0 %910
          %914 = vset.pattern.permute.xlu0 0
          %915 = vperm.xlu0 %914, %v861
          %v916 = vpop.permute.xlu0 %915
          %919 = vset.pattern.permute.xlu0 0
          %920 = vperm.xlu0 %919, %v862
          %v921 = vpop.permute.xlu0 %920
          %924 = vset.pattern.permute.xlu0 0
          %925 = vperm.xlu0 %924, %v863
          %v926 = vpop.permute.xlu0 %925
          %929 = vset.pattern.permute.xlu0 0
          %930 = vperm.xlu0 %929, %v864
          %v931 = vpop.permute.xlu0 %930
          %934 = vset.pattern.permute.xlu0 0
          %935 = vperm.xlu0 %934, %v865
          %v936 = vpop.permute.xlu0 %935
          %939 = vset.pattern.permute.xlu0 0
          %940 = vperm.xlu0 %939, %v866
          %v941 = vpop.permute.xlu0 %940
          %944 = vset.pattern.permute.xlu0 0
          %945 = vperm.xlu0 %944, %v867
          %v946 = vpop.permute.xlu0 %945
          %v948 = vsub.f32 %v836, %v871
          %v949 = vsub.f32 %v837, %v876
          %v950 = vsub.f32 %v838, %v881
          %v951 = vsub.f32 %v839, %v886
          %v952 = vsub.f32 %v840, %v891
          %v953 = vsub.f32 %v841, %v896
          %v954 = vsub.f32 %v842, %v901
          %v955 = vsub.f32 %v843, %v906
          %v956 = vsub.f32 %v844, %v911
          %v957 = vsub.f32 %v845, %v916
          %v958 = vsub.f32 %v846, %v921
          %v959 = vsub.f32 %v847, %v926
          %v960 = vsub.f32 %v848, %v931
          %v961 = vsub.f32 %v849, %v936
          %v962 = vsub.f32 %v850, %v941
          %v963 = vsub.f32 %v851, %v946
          %v964 = vld [vmem:[%s631] sm:$0x1]
          %v966 = vlaneseq
          %v967 = vshrl.u32 %v966, 7
          %v968 = vsub.s32 0, %v967
          %v969 = vrot.slane %v964, %v968
          %v971 = vsub.f32 %v948, %v969
          %v972 = vsub.f32 %v949, %v969
          %v973 = vsub.f32 %v950, %v969
          %v974 = vsub.f32 %v951, %v969
          %v975 = vsub.f32 %v952, %v969
          %v976 = vsub.f32 %v953, %v969
          %v977 = vsub.f32 %v954, %v969
          %v978 = vsub.f32 %v955, %v969
          %v979 = vsub.f32 %v956, %v969
          %v980 = vsub.f32 %v957, %v969
          %v981 = vsub.f32 %v958, %v969
          %v982 = vsub.f32 %v959, %v969
          %v983 = vsub.f32 %v960, %v969
          %v984 = vsub.f32 %v961, %v969
          %v985 = vsub.f32 %v962, %v969
          %v986 = vsub.f32 %v963, %v969
          %v987 = vmin.f32 %v971, 0.0
          %v988 = vmin.f32 %v972, 0.0
          %v989 = vmin.f32 %v973, 0.0
          %v990 = vmin.f32 %v974, 0.0
          %v991 = vmin.f32 %v975, 0.0
          %v992 = vmin.f32 %v976, 0.0
          %v993 = vmin.f32 %v977, 0.0
          %v994 = vmin.f32 %v978, 0.0
          %v995 = vmin.f32 %v979, 0.0
          %v996 = vmin.f32 %v980, 0.0
          %v997 = vmin.f32 %v981, 0.0
          %v998 = vmin.f32 %v982, 0.0
          %v999 = vmin.f32 %v983, 0.0
          %v1000 = vmin.f32 %v984, 0.0
          %v1001 = vmin.f32 %v985, 0.0
          %v1002 = vmin.f32 %v986, 0.0
          %v1003 = vsel %vm717, 0.0, %v987
          %v1004 = vsel %vm718, 0.0, %v988
          %v1005 = vsel %vm719, 0.0, %v989
          %v1006 = vsel %vm720, 0.0, %v990
          %v1007 = vsel %vm721, 0.0, %v991
          %v1008 = vsel %vm722, 0.0, %v992
          %v1009 = vsel %vm723, 0.0, %v993
          %v1010 = vsel %vm724, 0.0, %v994
          %v1011 = vsel %vm725, 0.0, %v995
          %v1012 = vsel %vm726, 0.0, %v996
          %v1013 = vsel %vm727, 0.0, %v997
          %v1014 = vsel %vm728, 0.0, %v998
          %v1015 = vsel %vm729, 0.0, %v999
          %v1016 = vsel %vm730, 0.0, %v1000
          %v1017 = vsel %vm731, 0.0, %v1001
          %v1018 = vsel %vm732, 0.0, %v1002
          %v1019 = vmul.f32 %v1003, 1.442695
          %v1020 = vpow.pop %v1019
          %v1021 = vmul.f32 %v1004, 1.442695
          %v1022 = vpow.pop %v1021
          %v1023 = vmul.f32 %v1005, 1.442695
          %v1024 = vpow.pop %v1023
          %v1025 = vmul.f32 %v1006, 1.442695
          %v1026 = vpow.pop %v1025
          %v1027 = vmul.f32 %v1007, 1.442695
          %v1028 = vpow.pop %v1027
          %v1029 = vmul.f32 %v1008, 1.442695
          %v1030 = vpow.pop %v1029
          %v1031 = vmul.f32 %v1009, 1.442695
          %v1032 = vpow.pop %v1031
          %v1033 = vmul.f32 %v1010, 1.442695
          %v1034 = vpow.pop %v1033
          %v1035 = vmul.f32 %v1011, 1.442695
          %v1036 = vpow.pop %v1035
          %v1037 = vmul.f32 %v1012, 1.442695
          %v1038 = vpow.pop %v1037
          %v1039 = vmul.f32 %v1013, 1.442695
          %v1040 = vpow.pop %v1039
          %v1041 = vmul.f32 %v1014, 1.442695
          %v1042 = vpow.pop %v1041
          %v1043 = vmul.f32 %v1015, 1.442695
          %v1044 = vpow.pop %v1043
          %v1045 = vmul.f32 %v1016, 1.442695
          %v1046 = vpow.pop %v1045
          %v1047 = vmul.f32 %v1017, 1.442695
          %v1048 = vpow.pop %v1047
          %v1049 = vmul.f32 %v1018, 1.442695
          %v1050 = vpow.pop %v1049
          %s1051 = scalar_lea.vmem %s610, 128 [#allocation2]
          %v1052 = vld [vmem:[%s1051] sm:$0xff]
          %v1053 = vld [vmem:[%s1051 + $0x8] sm:$0xff]
          %v1054 = vld [vmem:[%s1051 + $0x10] sm:$0xff]
          %v1055 = vld [vmem:[%s1051 + $0x18] sm:$0xff]
          %v1056 = vld [vmem:[%s1051 + $0x20] sm:$0xff]
          %v1057 = vld [vmem:[%s1051 + $0x28] sm:$0xff]
          %v1058 = vld [vmem:[%s1051 + $0x30] sm:$0xff]
          %v1059 = vld [vmem:[%s1051 + $0x38] sm:$0xff]
          %v1060 = vld [vmem:[%s1051 + $0x40] sm:$0xff]
          %v1061 = vld [vmem:[%s1051 + $0x48] sm:$0xff]
          %v1062 = vld [vmem:[%s1051 + $0x50] sm:$0xff]
          %v1063 = vld [vmem:[%s1051 + $0x58] sm:$0xff]
          %v1064 = vld [vmem:[%s1051 + $0x60] sm:$0xff]
          %v1065 = vld [vmem:[%s1051 + $0x68] sm:$0xff]
          %v1066 = vld [vmem:[%s1051 + $0x70] sm:$0xff]
          %v1067 = vld [vmem:[%s1051 + $0x78] sm:$0xff]
          %s1068 = scalar_lea.vmem %s617, 1 [#allocation3]
          %v1069 = vld [vmem:[%s1068] sm:$0x1]
          %1071 = vset.pattern.permute.xlu0 0
          %1072 = vperm.xlu0 %1071, %v1052
          %v1073 = vpop.permute.xlu0 %1072
          %1076 = vset.pattern.permute.xlu0 0
          %1077 = vperm.xlu0 %1076, %v1053
          %v1078 = vpop.permute.xlu0 %1077
          %1081 = vset.pattern.permute.xlu0 0
          %1082 = vperm.xlu0 %1081, %v1054
          %v1083 = vpop.permute.xlu0 %1082
          %1086 = vset.pattern.permute.xlu0 0
          %1087 = vperm.xlu0 %1086, %v1055
          %v1088 = vpop.permute.xlu0 %1087
          %1091 = vset.pattern.permute.xlu0 0
          %1092 = vperm.xlu0 %1091, %v1056
          %v1093 = vpop.permute.xlu0 %1092
          %1096 = vset.pattern.permute.xlu0 0
          %1097 = vperm.xlu0 %1096, %v1057
          %v1098 = vpop.permute.xlu0 %1097
          %1101 = vset.pattern.permute.xlu0 0
          %1102 = vperm.xlu0 %1101, %v1058
          %v1103 = vpop.permute.xlu0 %1102
          %1106 = vset.pattern.permute.xlu0 0
          %1107 = vperm.xlu0 %1106, %v1059
          %v1108 = vpop.permute.xlu0 %1107
          %1111 = vset.pattern.permute.xlu0 0
          %1112 = vperm.xlu0 %1111, %v1060
          %v1113 = vpop.permute.xlu0 %1112
          %1116 = vset.pattern.permute.xlu0 0
          %1117 = vperm.xlu0 %1116, %v1061
          %v1118 = vpop.permute.xlu0 %1117
          %1121 = vset.pattern.permute.xlu0 0
          %1122 = vperm.xlu0 %1121, %v1062
          %v1123 = vpop.permute.xlu0 %1122
          %1126 = vset.pattern.permute.xlu0 0
          %1127 = vperm.xlu0 %1126, %v1063
          %v1128 = vpop.permute.xlu0 %1127
          %1131 = vset.pattern.permute.xlu0 0
          %1132 = vperm.xlu0 %1131, %v1064
          %v1133 = vpop.permute.xlu0 %1132
          %1136 = vset.pattern.permute.xlu0 0
          %1137 = vperm.xlu0 %1136, %v1065
          %v1138 = vpop.permute.xlu0 %1137
          %1141 = vset.pattern.permute.xlu0 0
          %1142 = vperm.xlu0 %1141, %v1066
          %v1143 = vpop.permute.xlu0 %1142
          %1146 = vset.pattern.permute.xlu0 0
          %1147 = vperm.xlu0 %1146, %v1067
          %v1148 = vpop.permute.xlu0 %1147
          %v1151 = vlaneseq
          %v1152 = vshrl.u32 %v1151, 7
          %v1153 = vsub.s32 0, %v1152
          %v1154 = vrot.slane %v1069, %v1153
          %v1156 = vmul.f32 %v1073, %v1154
          %v1157 = vmul.f32 %v1078, %v1154
          %v1158 = vmul.f32 %v1083, %v1154
          %v1159 = vmul.f32 %v1088, %v1154
          %v1160 = vmul.f32 %v1093, %v1154
          %v1161 = vmul.f32 %v1098, %v1154
          %v1162 = vmul.f32 %v1103, %v1154
          %v1163 = vmul.f32 %v1108, %v1154
          %v1164 = vmul.f32 %v1113, %v1154
          %v1165 = vmul.f32 %v1118, %v1154
          %v1166 = vmul.f32 %v1123, %v1154
          %v1167 = vmul.f32 %v1128, %v1154
          %v1168 = vmul.f32 %v1133, %v1154
          %v1169 = vmul.f32 %v1138, %v1154
          %v1170 = vmul.f32 %v1143, %v1154
          %v1171 = vmul.f32 %v1148, %v1154
          %s1172 = scalar_lea.vmem %s624, 128 [#allocation4]
          %v1173 = vld [vmem:[%s1172] sm:$0xff]
          %v1174 = vld [vmem:[%s1172 + $0x8] sm:$0xff]
          %v1175 = vld [vmem:[%s1172 + $0x10] sm:$0xff]
          %v1176 = vld [vmem:[%s1172 + $0x18] sm:$0xff]
          %v1177 = vld [vmem:[%s1172 + $0x20] sm:$0xff]
          %v1178 = vld [vmem:[%s1172 + $0x28] sm:$0xff]
          %v1179 = vld [vmem:[%s1172 + $0x30] sm:$0xff]
          %v1180 = vld [vmem:[%s1172 + $0x38] sm:$0xff]
          %v1181 = vld [vmem:[%s1172 + $0x40] sm:$0xff]
          %v1182 = vld [vmem:[%s1172 + $0x48] sm:$0xff]
          %v1183 = vld [vmem:[%s1172 + $0x50] sm:$0xff]
          %v1184 = vld [vmem:[%s1172 + $0x58] sm:$0xff]
          %v1185 = vld [vmem:[%s1172 + $0x60] sm:$0xff]
          %v1186 = vld [vmem:[%s1172 + $0x68] sm:$0xff]
          %v1187 = vld [vmem:[%s1172 + $0x70] sm:$0xff]
          %v1188 = vld [vmem:[%s1172 + $0x78] sm:$0xff]
          %1190 = vset.pattern.permute.xlu0 0
          %1191 = vperm.xlu0 %1190, %v1173
          %v1192 = vpop.permute.xlu0 %1191
          %1195 = vset.pattern.permute.xlu0 0
          %1196 = vperm.xlu0 %1195, %v1174
          %v1197 = vpop.permute.xlu0 %1196
          %1200 = vset.pattern.permute.xlu0 0
          %1201 = vperm.xlu0 %1200, %v1175
          %v1202 = vpop.permute.xlu0 %1201
          %1205 = vset.pattern.permute.xlu0 0
          %1206 = vperm.xlu0 %1205, %v1176
          %v1207 = vpop.permute.xlu0 %1206
          %1210 = vset.pattern.permute.xlu0 0
          %1211 = vperm.xlu0 %1210, %v1177
          %v1212 = vpop.permute.xlu0 %1211
          %1215 = vset.pattern.permute.xlu0 0
          %1216 = vperm.xlu0 %1215, %v1178
          %v1217 = vpop.permute.xlu0 %1216
          %1220 = vset.pattern.permute.xlu0 0
          %1221 = vperm.xlu0 %1220, %v1179
          %v1222 = vpop.permute.xlu0 %1221
          %1225 = vset.pattern.permute.xlu0 0
          %1226 = vperm.xlu0 %1225, %v1180
          %v1227 = vpop.permute.xlu0 %1226
          %1230 = vset.pattern.permute.xlu0 0
          %1231 = vperm.xlu0 %1230, %v1181
          %v1232 = vpop.permute.xlu0 %1231
          %1235 = vset.pattern.permute.xlu0 0
          %1236 = vperm.xlu0 %1235, %v1182
          %v1237 = vpop.permute.xlu0 %1236
          %1240 = vset.pattern.permute.xlu0 0
          %1241 = vperm.xlu0 %1240, %v1183
          %v1242 = vpop.permute.xlu0 %1241
          %1245 = vset.pattern.permute.xlu0 0
          %1246 = vperm.xlu0 %1245, %v1184
          %v1247 = vpop.permute.xlu0 %1246
          %1250 = vset.pattern.permute.xlu0 0
          %1251 = vperm.xlu0 %1250, %v1185
          %v1252 = vpop.permute.xlu0 %1251
          %1255 = vset.pattern.permute.xlu0 0
          %1256 = vperm.xlu0 %1255, %v1186
          %v1257 = vpop.permute.xlu0 %1256
          %1260 = vset.pattern.permute.xlu0 0
          %1261 = vperm.xlu0 %1260, %v1187
          %v1262 = vpop.permute.xlu0 %1261
          %1265 = vset.pattern.permute.xlu0 0
          %1266 = vperm.xlu0 %1265, %v1188
          %v1267 = vpop.permute.xlu0 %1266
          %v1269 = vsub.f32 %v1156, %v1192
          %v1270 = vsub.f32 %v1157, %v1197
          %v1271 = vsub.f32 %v1158, %v1202
          %v1272 = vsub.f32 %v1159, %v1207
          %v1273 = vsub.f32 %v1160, %v1212
          %v1274 = vsub.f32 %v1161, %v1217
          %v1275 = vsub.f32 %v1162, %v1222
          %v1276 = vsub.f32 %v1163, %v1227
          %v1277 = vsub.f32 %v1164, %v1232
          %v1278 = vsub.f32 %v1165, %v1237
          %v1279 = vsub.f32 %v1166, %v1242
          %v1280 = vsub.f32 %v1167, %v1247
          %v1281 = vsub.f32 %v1168, %v1252
          %v1282 = vsub.f32 %v1169, %v1257
          %v1283 = vsub.f32 %v1170, %v1262
          %v1284 = vsub.f32 %v1171, %v1267
          %s1285 = scalar_lea.vmem %s631, 1 [#allocation5]
          %v1286 = vld [vmem:[%s1285] sm:$0x1]
          %v1288 = vlaneseq
          %v1289 = vshrl.u32 %v1288, 7
          %v1290 = vsub.s32 0, %v1289
          %v1291 = vrot.slane %v1286, %v1290
          %v1293 = vsub.f32 %v1269, %v1291
          %v1294 = vsub.f32 %v1270, %v1291
          %v1295 = vsub.f32 %v1271, %v1291
          %v1296 = vsub.f32 %v1272, %v1291
          %v1297 = vsub.f32 %v1273, %v1291
          %v1298 = vsub.f32 %v1274, %v1291
          %v1299 = vsub.f32 %v1275, %v1291
          %v1300 = vsub.f32 %v1276, %v1291
          %v1301 = vsub.f32 %v1277, %v1291
          %v1302 = vsub.f32 %v1278, %v1291
          %v1303 = vsub.f32 %v1279, %v1291
          %v1304 = vsub.f32 %v1280, %v1291
          %v1305 = vsub.f32 %v1281, %v1291
          %v1306 = vsub.f32 %v1282, %v1291
          %v1307 = vsub.f32 %v1283, %v1291
          %v1308 = vsub.f32 %v1284, %v1291
          %v1309 = vmin.f32 %v1293, 0.0
          %v1310 = vmin.f32 %v1294, 0.0
          %v1311 = vmin.f32 %v1295, 0.0
          %v1312 = vmin.f32 %v1296, 0.0
          %v1313 = vmin.f32 %v1297, 0.0
          %v1314 = vmin.f32 %v1298, 0.0
          %v1315 = vmin.f32 %v1299, 0.0
          %v1316 = vmin.f32 %v1300, 0.0
          %v1317 = vmin.f32 %v1301, 0.0
          %v1318 = vmin.f32 %v1302, 0.0
          %v1319 = vmin.f32 %v1303, 0.0
          %v1320 = vmin.f32 %v1304, 0.0
          %v1321 = vmin.f32 %v1305, 0.0
          %v1322 = vmin.f32 %v1306, 0.0
          %v1323 = vmin.f32 %v1307, 0.0
          %v1324 = vmin.f32 %v1308, 0.0
          %v1325 = vsel %vm717, 0.0, %v1309
          %v1326 = vsel %vm718, 0.0, %v1310
          %v1327 = vsel %vm719, 0.0, %v1311
          %v1328 = vsel %vm720, 0.0, %v1312
          %v1329 = vsel %vm721, 0.0, %v1313
          %v1330 = vsel %vm722, 0.0, %v1314
          %v1331 = vsel %vm723, 0.0, %v1315
          %v1332 = vsel %vm724, 0.0, %v1316
          %v1333 = vsel %vm725, 0.0, %v1317
          %v1334 = vsel %vm726, 0.0, %v1318
          %v1335 = vsel %vm727, 0.0, %v1319
          %v1336 = vsel %vm728, 0.0, %v1320
          %v1337 = vsel %vm729, 0.0, %v1321
          %v1338 = vsel %vm730, 0.0, %v1322
          %v1339 = vsel %vm731, 0.0, %v1323
          %v1340 = vsel %vm732, 0.0, %v1324
          %v1341 = vmul.f32 %v1325, 1.442695
          %v1342 = vpow.pop %v1341
          %v1343 = vmul.f32 %v1326, 1.442695
          %v1344 = vpow.pop %v1343
          %v1345 = vmul.f32 %v1327, 1.442695
          %v1346 = vpow.pop %v1345
          %v1347 = vmul.f32 %v1328, 1.442695
          %v1348 = vpow.pop %v1347
          %v1349 = vmul.f32 %v1329, 1.442695
          %v1350 = vpow.pop %v1349
          %v1351 = vmul.f32 %v1330, 1.442695
          %v1352 = vpow.pop %v1351
          %v1353 = vmul.f32 %v1331, 1.442695
          %v1354 = vpow.pop %v1353
          %v1355 = vmul.f32 %v1332, 1.442695
          %v1356 = vpow.pop %v1355
          %v1357 = vmul.f32 %v1333, 1.442695
          %v1358 = vpow.pop %v1357
          %v1359 = vmul.f32 %v1334, 1.442695
          %v1360 = vpow.pop %v1359
          %v1361 = vmul.f32 %v1335, 1.442695
          %v1362 = vpow.pop %v1361
          %v1363 = vmul.f32 %v1336, 1.442695
          %v1364 = vpow.pop %v1363
          %v1365 = vmul.f32 %v1337, 1.442695
          %v1366 = vpow.pop %v1365
          %v1367 = vmul.f32 %v1338, 1.442695
          %v1368 = vpow.pop %v1367
          %v1369 = vmul.f32 %v1339, 1.442695
          %v1370 = vpow.pop %v1369
          %v1371 = vmul.f32 %v1340, 1.442695
          %v1372 = vpow.pop %v1371
          %v1373 = vadd.f32 %v1020, %v1342
          %v1374 = vadd.f32 %v1022, %v1344
          %v1375 = vadd.f32 %v1024, %v1346
          %v1376 = vadd.f32 %v1026, %v1348
          %v1377 = vadd.f32 %v1028, %v1350
          %v1378 = vadd.f32 %v1030, %v1352
          %v1379 = vadd.f32 %v1032, %v1354
          %v1380 = vadd.f32 %v1034, %v1356
          %v1381 = vadd.f32 %v1036, %v1358
          %v1382 = vadd.f32 %v1038, %v1360
          %v1383 = vadd.f32 %v1040, %v1362
          %v1384 = vadd.f32 %v1042, %v1364
          %v1385 = vadd.f32 %v1044, %v1366
          %v1386 = vadd.f32 %v1046, %v1368
          %v1387 = vadd.f32 %v1048, %v1370
          %v1388 = vadd.f32 %v1050, %v1372
          %1389 = vst [vmem:[%s665] sm:$0xff] %v1373
          %1390 = vst [vmem:[%s665 + $0x8] sm:$0xff] %v1374
          %1391 = vst [vmem:[%s665 + $0x10] sm:$0xff] %v1375
          %1392 = vst [vmem:[%s665 + $0x18] sm:$0xff] %v1376
          %1393 = vst [vmem:[%s665 + $0x20] sm:$0xff] %v1377
          %1394 = vst [vmem:[%s665 + $0x28] sm:$0xff] %v1378
          %1395 = vst [vmem:[%s665 + $0x30] sm:$0xff] %v1379
          %1396 = vst [vmem:[%s665 + $0x38] sm:$0xff] %v1380
          %1397 = vst [vmem:[%s665 + $0x40] sm:$0xff] %v1381
          %1398 = vst [vmem:[%s665 + $0x48] sm:$0xff] %v1382
          %1399 = vst [vmem:[%s665 + $0x50] sm:$0xff] %v1383
          %1400 = vst [vmem:[%s665 + $0x58] sm:$0xff] %v1384
          %1401 = vst [vmem:[%s665 + $0x60] sm:$0xff] %v1385
          %1402 = vst [vmem:[%s665 + $0x68] sm:$0xff] %v1386
          %1403 = vst [vmem:[%s665 + $0x70] sm:$0xff] %v1387
          %1404 = vst [vmem:[%s665 + $0x78] sm:$0xff] %v1388
        $region184: #{tpu_custom_call.1} parent=163 // pred_fallthru
          _
        %p1405 = pneg %p676
        // Predicated region
        $region185: #{tpu_custom_call.1} parent=163 // pred_check
          _
        $region186: #{tpu_custom_call.1} parent=163 // pred_check_branch
          %1407 = sbr.rel (%p676) target = $region188
        $region187: #{tpu_custom_call.1} parent=163 // pred_region
          %v1408 = vld [vmem:[%s610] sm:$0xff]
          %v1409 = vld [vmem:[%s610 + $0x8] sm:$0xff]
          %v1410 = vld [vmem:[%s610 + $0x10] sm:$0xff]
          %v1411 = vld [vmem:[%s610 + $0x18] sm:$0xff]
          %v1412 = vld [vmem:[%s610 + $0x20] sm:$0xff]
          %v1413 = vld [vmem:[%s610 + $0x28] sm:$0xff]
          %v1414 = vld [vmem:[%s610 + $0x30] sm:$0xff]
          %v1415 = vld [vmem:[%s610 + $0x38] sm:$0xff]
          %v1416 = vld [vmem:[%s610 + $0x40] sm:$0xff]
          %v1417 = vld [vmem:[%s610 + $0x48] sm:$0xff]
          %v1418 = vld [vmem:[%s610 + $0x50] sm:$0xff]
          %v1419 = vld [vmem:[%s610 + $0x58] sm:$0xff]
          %v1420 = vld [vmem:[%s610 + $0x60] sm:$0xff]
          %v1421 = vld [vmem:[%s610 + $0x68] sm:$0xff]
          %v1422 = vld [vmem:[%s610 + $0x70] sm:$0xff]
          %v1423 = vld [vmem:[%s610 + $0x78] sm:$0xff]
          %v1424 = vld [vmem:[%s617] sm:$0x1]
          %1426 = vset.pattern.permute.xlu0 0
          %1427 = vperm.xlu0 %1426, %v1408
          %v1428 = vpop.permute.xlu0 %1427
          %1431 = vset.pattern.permute.xlu0 0
          %1432 = vperm.xlu0 %1431, %v1409
          %v1433 = vpop.permute.xlu0 %1432
          %1436 = vset.pattern.permute.xlu0 0
          %1437 = vperm.xlu0 %1436, %v1410
          %v1438 = vpop.permute.xlu0 %1437
          %1441 = vset.pattern.permute.xlu0 0
          %1442 = vperm.xlu0 %1441, %v1411
          %v1443 = vpop.permute.xlu0 %1442
          %1446 = vset.pattern.permute.xlu0 0
          %1447 = vperm.xlu0 %1446, %v1412
          %v1448 = vpop.permute.xlu0 %1447
          %1451 = vset.pattern.permute.xlu0 0
          %1452 = vperm.xlu0 %1451, %v1413
          %v1453 = vpop.permute.xlu0 %1452
          %1456 = vset.pattern.permute.xlu0 0
          %1457 = vperm.xlu0 %1456, %v1414
          %v1458 = vpop.permute.xlu0 %1457
          %1461 = vset.pattern.permute.xlu0 0
          %1462 = vperm.xlu0 %1461, %v1415
          %v1463 = vpop.permute.xlu0 %1462
          %1466 = vset.pattern.permute.xlu0 0
          %1467 = vperm.xlu0 %1466, %v1416
          %v1468 = vpop.permute.xlu0 %1467
          %1471 = vset.pattern.permute.xlu0 0
          %1472 = vperm.xlu0 %1471, %v1417
          %v1473 = vpop.permute.xlu0 %1472
          %1476 = vset.pattern.permute.xlu0 0
          %1477 = vperm.xlu0 %1476, %v1418
          %v1478 = vpop.permute.xlu0 %1477
          %1481 = vset.pattern.permute.xlu0 0
          %1482 = vperm.xlu0 %1481, %v1419
          %v1483 = vpop.permute.xlu0 %1482
          %1486 = vset.pattern.permute.xlu0 0
          %1487 = vperm.xlu0 %1486, %v1420
          %v1488 = vpop.permute.xlu0 %1487
          %1491 = vset.pattern.permute.xlu0 0
          %1492 = vperm.xlu0 %1491, %v1421
          %v1493 = vpop.permute.xlu0 %1492
          %1496 = vset.pattern.permute.xlu0 0
          %1497 = vperm.xlu0 %1496, %v1422
          %v1498 = vpop.permute.xlu0 %1497
          %1501 = vset.pattern.permute.xlu0 0
          %1502 = vperm.xlu0 %1501, %v1423
          %v1503 = vpop.permute.xlu0 %1502
          %v1506 = vlaneseq
          %v1507 = vshrl.u32 %v1506, 7
          %v1508 = vsub.s32 0, %v1507
          %v1509 = vrot.slane %v1424, %v1508
          %v1511 = vmul.f32 %v1428, %v1509
          %v1512 = vmul.f32 %v1433, %v1509
          %v1513 = vmul.f32 %v1438, %v1509
          %v1514 = vmul.f32 %v1443, %v1509
          %v1515 = vmul.f32 %v1448, %v1509
          %v1516 = vmul.f32 %v1453, %v1509
          %v1517 = vmul.f32 %v1458, %v1509
          %v1518 = vmul.f32 %v1463, %v1509
          %v1519 = vmul.f32 %v1468, %v1509
          %v1520 = vmul.f32 %v1473, %v1509
          %v1521 = vmul.f32 %v1478, %v1509
          %v1522 = vmul.f32 %v1483, %v1509
          %v1523 = vmul.f32 %v1488, %v1509
          %v1524 = vmul.f32 %v1493, %v1509
          %v1525 = vmul.f32 %v1498, %v1509
          %v1526 = vmul.f32 %v1503, %v1509
          %v1527 = vld [vmem:[%s624] sm:$0xff]
          %v1528 = vld [vmem:[%s624 + $0x8] sm:$0xff]
          %v1529 = vld [vmem:[%s624 + $0x10] sm:$0xff]
          %v1530 = vld [vmem:[%s624 + $0x18] sm:$0xff]
          %v1531 = vld [vmem:[%s624 + $0x20] sm:$0xff]
          %v1532 = vld [vmem:[%s624 + $0x28] sm:$0xff]
          %v1533 = vld [vmem:[%s624 + $0x30] sm:$0xff]
          %v1534 = vld [vmem:[%s624 + $0x38] sm:$0xff]
          %v1535 = vld [vmem:[%s624 + $0x40] sm:$0xff]
          %v1536 = vld [vmem:[%s624 + $0x48] sm:$0xff]
          %v1537 = vld [vmem:[%s624 + $0x50] sm:$0xff]
          %v1538 = vld [vmem:[%s624 + $0x58] sm:$0xff]
          %v1539 = vld [vmem:[%s624 + $0x60] sm:$0xff]
          %v1540 = vld [vmem:[%s624 + $0x68] sm:$0xff]
          %v1541 = vld [vmem:[%s624 + $0x70] sm:$0xff]
          %v1542 = vld [vmem:[%s624 + $0x78] sm:$0xff]
          %1544 = vset.pattern.permute.xlu0 0
          %1545 = vperm.xlu0 %1544, %v1527
          %v1546 = vpop.permute.xlu0 %1545
          %1549 = vset.pattern.permute.xlu0 0
          %1550 = vperm.xlu0 %1549, %v1528
          %v1551 = vpop.permute.xlu0 %1550
          %1554 = vset.pattern.permute.xlu0 0
          %1555 = vperm.xlu0 %1554, %v1529
          %v1556 = vpop.permute.xlu0 %1555
          %1559 = vset.pattern.permute.xlu0 0
          %1560 = vperm.xlu0 %1559, %v1530
          %v1561 = vpop.permute.xlu0 %1560
          %1564 = vset.pattern.permute.xlu0 0
          %1565 = vperm.xlu0 %1564, %v1531
          %v1566 = vpop.permute.xlu0 %1565
          %1569 = vset.pattern.permute.xlu0 0
          %1570 = vperm.xlu0 %1569, %v1532
          %v1571 = vpop.permute.xlu0 %1570
          %1574 = vset.pattern.permute.xlu0 0
          %1575 = vperm.xlu0 %1574, %v1533
          %v1576 = vpop.permute.xlu0 %1575
          %1579 = vset.pattern.permute.xlu0 0
          %1580 = vperm.xlu0 %1579, %v1534
          %v1581 = vpop.permute.xlu0 %1580
          %1584 = vset.pattern.permute.xlu0 0
          %1585 = vperm.xlu0 %1584, %v1535
          %v1586 = vpop.permute.xlu0 %1585
          %1589 = vset.pattern.permute.xlu0 0
          %1590 = vperm.xlu0 %1589, %v1536
          %v1591 = vpop.permute.xlu0 %1590
          %1594 = vset.pattern.permute.xlu0 0
          %1595 = vperm.xlu0 %1594, %v1537
          %v1596 = vpop.permute.xlu0 %1595
          %1599 = vset.pattern.permute.xlu0 0
          %1600 = vperm.xlu0 %1599, %v1538
          %v1601 = vpop.permute.xlu0 %1600
          %1604 = vset.pattern.permute.xlu0 0
          %1605 = vperm.xlu0 %1604, %v1539
          %v1606 = vpop.permute.xlu0 %1605
          %1609 = vset.pattern.permute.xlu0 0
          %1610 = vperm.xlu0 %1609, %v1540
          %v1611 = vpop.permute.xlu0 %1610
          %1614 = vset.pattern.permute.xlu0 0
          %1615 = vperm.xlu0 %1614, %v1541
          %v1616 = vpop.permute.xlu0 %1615
          %1619 = vset.pattern.permute.xlu0 0
          %1620 = vperm.xlu0 %1619, %v1542
          %v1621 = vpop.permute.xlu0 %1620
          %v1623 = vsub.f32 %v1511, %v1546
          %v1624 = vsub.f32 %v1512, %v1551
          %v1625 = vsub.f32 %v1513, %v1556
          %v1626 = vsub.f32 %v1514, %v1561
          %v1627 = vsub.f32 %v1515, %v1566
          %v1628 = vsub.f32 %v1516, %v1571
          %v1629 = vsub.f32 %v1517, %v1576
          %v1630 = vsub.f32 %v1518, %v1581
          %v1631 = vsub.f32 %v1519, %v1586
          %v1632 = vsub.f32 %v1520, %v1591
          %v1633 = vsub.f32 %v1521, %v1596
          %v1634 = vsub.f32 %v1522, %v1601
          %v1635 = vsub.f32 %v1523, %v1606
          %v1636 = vsub.f32 %v1524, %v1611
          %v1637 = vsub.f32 %v1525, %v1616
          %v1638 = vsub.f32 %v1526, %v1621
          %v1639 = vld [vmem:[%s631] sm:$0x1]
          %v1641 = vlaneseq
          %v1642 = vshrl.u32 %v1641, 7
          %v1643 = vsub.s32 0, %v1642
          %v1644 = vrot.slane %v1639, %v1643
          %v1646 = vsub.f32 %v1623, %v1644
          %v1647 = vsub.f32 %v1624, %v1644
          %v1648 = vsub.f32 %v1625, %v1644
          %v1649 = vsub.f32 %v1626, %v1644
          %v1650 = vsub.f32 %v1627, %v1644
          %v1651 = vsub.f32 %v1628, %v1644
          %v1652 = vsub.f32 %v1629, %v1644
          %v1653 = vsub.f32 %v1630, %v1644
          %v1654 = vsub.f32 %v1631, %v1644
          %v1655 = vsub.f32 %v1632, %v1644
          %v1656 = vsub.f32 %v1633, %v1644
          %v1657 = vsub.f32 %v1634, %v1644
          %v1658 = vsub.f32 %v1635, %v1644
          %v1659 = vsub.f32 %v1636, %v1644
          %v1660 = vsub.f32 %v1637, %v1644
          %v1661 = vsub.f32 %v1638, %v1644
          %v1662 = vmin.f32 %v1646, 0.0
          %v1663 = vmin.f32 %v1647, 0.0
          %v1664 = vmin.f32 %v1648, 0.0
          %v1665 = vmin.f32 %v1649, 0.0
          %v1666 = vmin.f32 %v1650, 0.0
          %v1667 = vmin.f32 %v1651, 0.0
          %v1668 = vmin.f32 %v1652, 0.0
          %v1669 = vmin.f32 %v1653, 0.0
          %v1670 = vmin.f32 %v1654, 0.0
          %v1671 = vmin.f32 %v1655, 0.0
          %v1672 = vmin.f32 %v1656, 0.0
          %v1673 = vmin.f32 %v1657, 0.0
          %v1674 = vmin.f32 %v1658, 0.0
          %v1675 = vmin.f32 %v1659, 0.0
          %v1676 = vmin.f32 %v1660, 0.0
          %v1677 = vmin.f32 %v1661, 0.0
          %v1678 = vmul.f32 %v1662, 1.442695
          %v1679 = vpow.pop %v1678
          %v1680 = vmul.f32 %v1663, 1.442695
          %v1681 = vpow.pop %v1680
          %v1682 = vmul.f32 %v1664, 1.442695
          %v1683 = vpow.pop %v1682
          %v1684 = vmul.f32 %v1665, 1.442695
          %v1685 = vpow.pop %v1684
          %v1686 = vmul.f32 %v1666, 1.442695
          %v1687 = vpow.pop %v1686
          %v1688 = vmul.f32 %v1667, 1.442695
          %v1689 = vpow.pop %v1688
          %v1690 = vmul.f32 %v1668, 1.442695
          %v1691 = vpow.pop %v1690
          %v1692 = vmul.f32 %v1669, 1.442695
          %v1693 = vpow.pop %v1692
          %v1694 = vmul.f32 %v1670, 1.442695
          %v1695 = vpow.pop %v1694
          %v1696 = vmul.f32 %v1671, 1.442695
          %v1697 = vpow.pop %v1696
          %v1698 = vmul.f32 %v1672, 1.442695
          %v1699 = vpow.pop %v1698
          %v1700 = vmul.f32 %v1673, 1.442695
          %v1701 = vpow.pop %v1700
          %v1702 = vmul.f32 %v1674, 1.442695
          %v1703 = vpow.pop %v1702
          %v1704 = vmul.f32 %v1675, 1.442695
          %v1705 = vpow.pop %v1704
          %v1706 = vmul.f32 %v1676, 1.442695
          %v1707 = vpow.pop %v1706
          %v1708 = vmul.f32 %v1677, 1.442695
          %v1709 = vpow.pop %v1708
          %s1710 = scalar_lea.vmem %s610, 128 [#allocation2]
          %v1711 = vld [vmem:[%s1710] sm:$0xff]
          %v1712 = vld [vmem:[%s1710 + $0x8] sm:$0xff]
          %v1713 = vld [vmem:[%s1710 + $0x10] sm:$0xff]
          %v1714 = vld [vmem:[%s1710 + $0x18] sm:$0xff]
          %v1715 = vld [vmem:[%s1710 + $0x20] sm:$0xff]
          %v1716 = vld [vmem:[%s1710 + $0x28] sm:$0xff]
          %v1717 = vld [vmem:[%s1710 + $0x30] sm:$0xff]
          %v1718 = vld [vmem:[%s1710 + $0x38] sm:$0xff]
          %v1719 = vld [vmem:[%s1710 + $0x40] sm:$0xff]
          %v1720 = vld [vmem:[%s1710 + $0x48] sm:$0xff]
          %v1721 = vld [vmem:[%s1710 + $0x50] sm:$0xff]
          %v1722 = vld [vmem:[%s1710 + $0x58] sm:$0xff]
          %v1723 = vld [vmem:[%s1710 + $0x60] sm:$0xff]
          %v1724 = vld [vmem:[%s1710 + $0x68] sm:$0xff]
          %v1725 = vld [vmem:[%s1710 + $0x70] sm:$0xff]
          %v1726 = vld [vmem:[%s1710 + $0x78] sm:$0xff]
          %s1727 = scalar_lea.vmem %s617, 1 [#allocation3]
          %v1728 = vld [vmem:[%s1727] sm:$0x1]
          %1730 = vset.pattern.permute.xlu0 0
          %1731 = vperm.xlu0 %1730, %v1711
          %v1732 = vpop.permute.xlu0 %1731
          %1735 = vset.pattern.permute.xlu0 0
          %1736 = vperm.xlu0 %1735, %v1712
          %v1737 = vpop.permute.xlu0 %1736
          %1740 = vset.pattern.permute.xlu0 0
          %1741 = vperm.xlu0 %1740, %v1713
          %v1742 = vpop.permute.xlu0 %1741
          %1745 = vset.pattern.permute.xlu0 0
          %1746 = vperm.xlu0 %1745, %v1714
          %v1747 = vpop.permute.xlu0 %1746
          %1750 = vset.pattern.permute.xlu0 0
          %1751 = vperm.xlu0 %1750, %v1715
          %v1752 = vpop.permute.xlu0 %1751
          %1755 = vset.pattern.permute.xlu0 0
          %1756 = vperm.xlu0 %1755, %v1716
          %v1757 = vpop.permute.xlu0 %1756
          %1760 = vset.pattern.permute.xlu0 0
          %1761 = vperm.xlu0 %1760, %v1717
          %v1762 = vpop.permute.xlu0 %1761
          %1765 = vset.pattern.permute.xlu0 0
          %1766 = vperm.xlu0 %1765, %v1718
          %v1767 = vpop.permute.xlu0 %1766
          %1770 = vset.pattern.permute.xlu0 0
          %1771 = vperm.xlu0 %1770, %v1719
          %v1772 = vpop.permute.xlu0 %1771
          %1775 = vset.pattern.permute.xlu0 0
          %1776 = vperm.xlu0 %1775, %v1720
          %v1777 = vpop.permute.xlu0 %1776
          %1780 = vset.pattern.permute.xlu0 0
          %1781 = vperm.xlu0 %1780, %v1721
          %v1782 = vpop.permute.xlu0 %1781
          %1785 = vset.pattern.permute.xlu0 0
          %1786 = vperm.xlu0 %1785, %v1722
          %v1787 = vpop.permute.xlu0 %1786
          %1790 = vset.pattern.permute.xlu0 0
          %1791 = vperm.xlu0 %1790, %v1723
          %v1792 = vpop.permute.xlu0 %1791
          %1795 = vset.pattern.permute.xlu0 0
          %1796 = vperm.xlu0 %1795, %v1724
          %v1797 = vpop.permute.xlu0 %1796
          %1800 = vset.pattern.permute.xlu0 0
          %1801 = vperm.xlu0 %1800, %v1725
          %v1802 = vpop.permute.xlu0 %1801
          %1805 = vset.pattern.permute.xlu0 0
          %1806 = vperm.xlu0 %1805, %v1726
          %v1807 = vpop.permute.xlu0 %1806
          %v1810 = vlaneseq
          %v1811 = vshrl.u32 %v1810, 7
          %v1812 = vsub.s32 0, %v1811
          %v1813 = vrot.slane %v1728, %v1812
          %v1815 = vmul.f32 %v1732, %v1813
          %v1816 = vmul.f32 %v1737, %v1813
          %v1817 = vmul.f32 %v1742, %v1813
          %v1818 = vmul.f32 %v1747, %v1813
          %v1819 = vmul.f32 %v1752, %v1813
          %v1820 = vmul.f32 %v1757, %v1813
          %v1821 = vmul.f32 %v1762, %v1813
          %v1822 = vmul.f32 %v1767, %v1813
          %v1823 = vmul.f32 %v1772, %v1813
          %v1824 = vmul.f32 %v1777, %v1813
          %v1825 = vmul.f32 %v1782, %v1813
          %v1826 = vmul.f32 %v1787, %v1813
          %v1827 = vmul.f32 %v1792, %v1813
          %v1828 = vmul.f32 %v1797, %v1813
          %v1829 = vmul.f32 %v1802, %v1813
          %v1830 = vmul.f32 %v1807, %v1813
          %s1831 = scalar_lea.vmem %s624, 128 [#allocation4]
          %v1832 = vld [vmem:[%s1831] sm:$0xff]
          %v1833 = vld [vmem:[%s1831 + $0x8] sm:$0xff]
          %v1834 = vld [vmem:[%s1831 + $0x10] sm:$0xff]
          %v1835 = vld [vmem:[%s1831 + $0x18] sm:$0xff]
          %v1836 = vld [vmem:[%s1831 + $0x20] sm:$0xff]
          %v1837 = vld [vmem:[%s1831 + $0x28] sm:$0xff]
          %v1838 = vld [vmem:[%s1831 + $0x30] sm:$0xff]
          %v1839 = vld [vmem:[%s1831 + $0x38] sm:$0xff]
          %v1840 = vld [vmem:[%s1831 + $0x40] sm:$0xff]
          %v1841 = vld [vmem:[%s1831 + $0x48] sm:$0xff]
          %v1842 = vld [vmem:[%s1831 + $0x50] sm:$0xff]
          %v1843 = vld [vmem:[%s1831 + $0x58] sm:$0xff]
          %v1844 = vld [vmem:[%s1831 + $0x60] sm:$0xff]
          %v1845 = vld [vmem:[%s1831 + $0x68] sm:$0xff]
          %v1846 = vld [vmem:[%s1831 + $0x70] sm:$0xff]
          %v1847 = vld [vmem:[%s1831 + $0x78] sm:$0xff]
          %1849 = vset.pattern.permute.xlu0 0
          %1850 = vperm.xlu0 %1849, %v1832
          %v1851 = vpop.permute.xlu0 %1850
          %1854 = vset.pattern.permute.xlu0 0
          %1855 = vperm.xlu0 %1854, %v1833
          %v1856 = vpop.permute.xlu0 %1855
          %1859 = vset.pattern.permute.xlu0 0
          %1860 = vperm.xlu0 %1859, %v1834
          %v1861 = vpop.permute.xlu0 %1860
          %1864 = vset.pattern.permute.xlu0 0
          %1865 = vperm.xlu0 %1864, %v1835
          %v1866 = vpop.permute.xlu0 %1865
          %1869 = vset.pattern.permute.xlu0 0
          %1870 = vperm.xlu0 %1869, %v1836
          %v1871 = vpop.permute.xlu0 %1870
          %1874 = vset.pattern.permute.xlu0 0
          %1875 = vperm.xlu0 %1874, %v1837
          %v1876 = vpop.permute.xlu0 %1875
          %1879 = vset.pattern.permute.xlu0 0
          %1880 = vperm.xlu0 %1879, %v1838
          %v1881 = vpop.permute.xlu0 %1880
          %1884 = vset.pattern.permute.xlu0 0
          %1885 = vperm.xlu0 %1884, %v1839
          %v1886 = vpop.permute.xlu0 %1885
          %1889 = vset.pattern.permute.xlu0 0
          %1890 = vperm.xlu0 %1889, %v1840
          %v1891 = vpop.permute.xlu0 %1890
          %1894 = vset.pattern.permute.xlu0 0
          %1895 = vperm.xlu0 %1894, %v1841
          %v1896 = vpop.permute.xlu0 %1895
          %1899 = vset.pattern.permute.xlu0 0
          %1900 = vperm.xlu0 %1899, %v1842
          %v1901 = vpop.permute.xlu0 %1900
          %1904 = vset.pattern.permute.xlu0 0
          %1905 = vperm.xlu0 %1904, %v1843
          %v1906 = vpop.permute.xlu0 %1905
          %1909 = vset.pattern.permute.xlu0 0
          %1910 = vperm.xlu0 %1909, %v1844
          %v1911 = vpop.permute.xlu0 %1910
          %1914 = vset.pattern.permute.xlu0 0
          %1915 = vperm.xlu0 %1914, %v1845
          %v1916 = vpop.permute.xlu0 %1915
          %1919 = vset.pattern.permute.xlu0 0
          %1920 = vperm.xlu0 %1919, %v1846
          %v1921 = vpop.permute.xlu0 %1920
          %1924 = vset.pattern.permute.xlu0 0
          %1925 = vperm.xlu0 %1924, %v1847
          %v1926 = vpop.permute.xlu0 %1925
          %v1928 = vsub.f32 %v1815, %v1851
          %v1929 = vsub.f32 %v1816, %v1856
          %v1930 = vsub.f32 %v1817, %v1861
          %v1931 = vsub.f32 %v1818, %v1866
          %v1932 = vsub.f32 %v1819, %v1871
          %v1933 = vsub.f32 %v1820, %v1876
          %v1934 = vsub.f32 %v1821, %v1881
          %v1935 = vsub.f32 %v1822, %v1886
          %v1936 = vsub.f32 %v1823, %v1891
          %v1937 = vsub.f32 %v1824, %v1896
          %v1938 = vsub.f32 %v1825, %v1901
          %v1939 = vsub.f32 %v1826, %v1906
          %v1940 = vsub.f32 %v1827, %v1911
          %v1941 = vsub.f32 %v1828, %v1916
          %v1942 = vsub.f32 %v1829, %v1921
          %v1943 = vsub.f32 %v1830, %v1926
          %s1944 = scalar_lea.vmem %s631, 1 [#allocation5]
          %v1945 = vld [vmem:[%s1944] sm:$0x1]
          %v1947 = vlaneseq
          %v1948 = vshrl.u32 %v1947, 7
          %v1949 = vsub.s32 0, %v1948
          %v1950 = vrot.slane %v1945, %v1949
          %v1952 = vsub.f32 %v1928, %v1950
          %v1953 = vsub.f32 %v1929, %v1950
          %v1954 = vsub.f32 %v1930, %v1950
          %v1955 = vsub.f32 %v1931, %v1950
          %v1956 = vsub.f32 %v1932, %v1950
          %v1957 = vsub.f32 %v1933, %v1950
          %v1958 = vsub.f32 %v1934, %v1950
          %v1959 = vsub.f32 %v1935, %v1950
          %v1960 = vsub.f32 %v1936, %v1950
          %v1961 = vsub.f32 %v1937, %v1950
          %v1962 = vsub.f32 %v1938, %v1950
          %v1963 = vsub.f32 %v1939, %v1950
          %v1964 = vsub.f32 %v1940, %v1950
          %v1965 = vsub.f32 %v1941, %v1950
          %v1966 = vsub.f32 %v1942, %v1950
          %v1967 = vsub.f32 %v1943, %v1950
          %v1968 = vmin.f32 %v1952, 0.0
          %v1969 = vmin.f32 %v1953, 0.0
          %v1970 = vmin.f32 %v1954, 0.0
          %v1971 = vmin.f32 %v1955, 0.0
          %v1972 = vmin.f32 %v1956, 0.0
          %v1973 = vmin.f32 %v1957, 0.0
          %v1974 = vmin.f32 %v1958, 0.0
          %v1975 = vmin.f32 %v1959, 0.0
          %v1976 = vmin.f32 %v1960, 0.0
          %v1977 = vmin.f32 %v1961, 0.0
          %v1978 = vmin.f32 %v1962, 0.0
          %v1979 = vmin.f32 %v1963, 0.0
          %v1980 = vmin.f32 %v1964, 0.0
          %v1981 = vmin.f32 %v1965, 0.0
          %v1982 = vmin.f32 %v1966, 0.0
          %v1983 = vmin.f32 %v1967, 0.0
          %v1984 = vmul.f32 %v1968, 1.442695
          %v1985 = vpow.pop %v1984
          %v1986 = vmul.f32 %v1969, 1.442695
          %v1987 = vpow.pop %v1986
          %v1988 = vmul.f32 %v1970, 1.442695
          %v1989 = vpow.pop %v1988
          %v1990 = vmul.f32 %v1971, 1.442695
          %v1991 = vpow.pop %v1990
          %v1992 = vmul.f32 %v1972, 1.442695
          %v1993 = vpow.pop %v1992
          %v1994 = vmul.f32 %v1973, 1.442695
          %v1995 = vpow.pop %v1994
          %v1996 = vmul.f32 %v1974, 1.442695
          %v1997 = vpow.pop %v1996
          %v1998 = vmul.f32 %v1975, 1.442695
          %v1999 = vpow.pop %v1998
          %v2000 = vmul.f32 %v1976, 1.442695
          %v2001 = vpow.pop %v2000
          %v2002 = vmul.f32 %v1977, 1.442695
          %v2003 = vpow.pop %v2002
          %v2004 = vmul.f32 %v1978, 1.442695
          %v2005 = vpow.pop %v2004
          %v2006 = vmul.f32 %v1979, 1.442695
          %v2007 = vpow.pop %v2006
          %v2008 = vmul.f32 %v1980, 1.442695
          %v2009 = vpow.pop %v2008
          %v2010 = vmul.f32 %v1981, 1.442695
          %v2011 = vpow.pop %v2010
          %v2012 = vmul.f32 %v1982, 1.442695
          %v2013 = vpow.pop %v2012
          %v2014 = vmul.f32 %v1983, 1.442695
          %v2015 = vpow.pop %v2014
          %v2016 = vadd.f32 %v1679, %v1985
          %v2017 = vadd.f32 %v1681, %v1987
          %v2018 = vadd.f32 %v1683, %v1989
          %v2019 = vadd.f32 %v1685, %v1991
          %v2020 = vadd.f32 %v1687, %v1993
          %v2021 = vadd.f32 %v1689, %v1995
          %v2022 = vadd.f32 %v1691, %v1997
          %v2023 = vadd.f32 %v1693, %v1999
          %v2024 = vadd.f32 %v1695, %v2001
          %v2025 = vadd.f32 %v1697, %v2003
          %v2026 = vadd.f32 %v1699, %v2005
          %v2027 = vadd.f32 %v1701, %v2007
          %v2028 = vadd.f32 %v1703, %v2009
          %v2029 = vadd.f32 %v1705, %v2011
          %v2030 = vadd.f32 %v1707, %v2013
          %v2031 = vadd.f32 %v1709, %v2015
          %2032 = vst [vmem:[%s665] sm:$0xff] %v2016
          %2033 = vst [vmem:[%s665 + $0x8] sm:$0xff] %v2017
          %2034 = vst [vmem:[%s665 + $0x10] sm:$0xff] %v2018
          %2035 = vst [vmem:[%s665 + $0x18] sm:$0xff] %v2019
          %2036 = vst [vmem:[%s665 + $0x20] sm:$0xff] %v2020
          %2037 = vst [vmem:[%s665 + $0x28] sm:$0xff] %v2021
          %2038 = vst [vmem:[%s665 + $0x30] sm:$0xff] %v2022
          %2039 = vst [vmem:[%s665 + $0x38] sm:$0xff] %v2023
          %2040 = vst [vmem:[%s665 + $0x40] sm:$0xff] %v2024
          %2041 = vst [vmem:[%s665 + $0x48] sm:$0xff] %v2025
          %2042 = vst [vmem:[%s665 + $0x50] sm:$0xff] %v2026
          %2043 = vst [vmem:[%s665 + $0x58] sm:$0xff] %v2027
          %2044 = vst [vmem:[%s665 + $0x60] sm:$0xff] %v2028
          %2045 = vst [vmem:[%s665 + $0x68] sm:$0xff] %v2029
          %2046 = vst [vmem:[%s665 + $0x70] sm:$0xff] %v2030
          %2047 = vst [vmem:[%s665 + $0x78] sm:$0xff] %v2031
        $region188: #{tpu_custom_call.1} parent=163 // pred_fallthru
          _
        %s2048 = sand.u32 %s144, 1
        %s2049 = scalar_lea.sflag [#allocation7], %s2048
        %s2050 = sand.u32 %s144, 1
        %s2051 = smul.addr %s2050, 128
        %s2052 = scalar_lea.vmem [#allocation6], %s2051
        // Predicated region
        $region189: #{tpu_custom_call.1} parent=163 // pred_check
          %p2053 = pneg %p154
        $region190: #{tpu_custom_call.1} parent=163 // pred_check_branch
          %2055 = sbr.rel (%p2053) target = $region192
        $region191: #{tpu_custom_call.1} parent=163 // pred_region
          %s2056 = smul.u32 16, %s22
          %s2058 = ssub.s32 2048, 2048
          %2059 = vsyncadd %s2049, %s2058
          %s2060 = smul.addr %s2056, 3
          %s2061 = sadd.s32 %s23, %s2060
          %s2062 = smul.addr %s2061, 128
          %s2063 = scalar_lea.hbm %s4, %s2062
          %s2064 = sshll.u32 %s2052, 4
          %s2065 = int_to_ptr.vmem [resolvable:$true] %s2064
          %2070 = dma.vmem_to_hbm [thread:$0]  %s2065, 2048, %s2063, %s2049, 128, 384, 8
        $region192: #{tpu_custom_call.1} parent=163 // pred_fallthru
          _
      $region164: #{tpu_custom_call.1} parent=5 // pred_fallthru
        _
      %p2071 = scmp.le.s32.totalorder 2, %s13
      // Predicated region
      $region193: #{tpu_custom_call.1} parent=5 // pred_check
        %p2072 = pneg %p2071
      $region194: #{tpu_custom_call.1} parent=5 // pred_check_branch
        %2074 = sbr.rel (%p2072) target = $region196
      $region195: #{tpu_custom_call.1} parent=5 // pred_region
        %s2075 = ssub.s32 %s13, 2
        // Predicated region
        $region197: #{tpu_custom_call.1} parent=195 // pred_check
          %p2076 = pneg %p160
        $region198: #{tpu_custom_call.1} parent=195 // pred_check_branch
          %2078 = sbr.rel (%p2076) target = $region200
        $region199: #{tpu_custom_call.1} parent=195 // pred_region
          %s2079 = sand.u32 %s145, 1
          %s2080 = scalar_lea.sflag [#allocation7], %s2079
          %s2081 = sand.u32 %s145, 1
          %s2082 = smul.addr %s2081, 128
          %s2083 = scalar_lea.vmem [#allocation6], %s2082
          %2084 = dma.done %s2080, 2048
        $region200: #{tpu_custom_call.1} parent=195 // pred_fallthru
          _
      $region196: #{tpu_custom_call.1} parent=5 // pred_fallthru
        _
    $region6: #{tpu_custom_call.1} parent=1 // loop_footer
      %s17 = sadd.s32 1, %s13
    $region7: #{tpu_custom_call.1} parent=1 // loop_footer_branch
      %12 = sbr.rel target = $region3
    $region8: #{tpu_custom_call.1} parent=1 // loop_exit
      _
    %2085 = vsyncpa [#allocation7], 1
    %s2086 = scalar_lea.sflag [#allocation7], 1
    %2087 = vsyncpa %s2086, 1

</llo_original>
